<compile_context>
chip_gen: v7x
topology: tpu7x:2x2x1
jax: 0.10.0
libtpu: 0.0.40
codegen_flags: <defaults>
</compile_context>

<pallas_src>
import functools

import numpy as np
import jax
import jax.numpy as jnp
from jax.experimental import pallas as pl
from jax.experimental.pallas import tpu as pltpu


# Tap order (dy, dx) == (ky-1, kx-1): matches the (o, ky, kx, ci) weight packing.
_TAPS = tuple((dy, dx) for dy in (-1, 0, 1) for dx in (-1, 0, 1))


def _hfused_resblock_kernel(sid_ref, scale_ref, mask_ref, x_ref,
                            w1_ref, b1_ref, w2_ref, b2_ref, out_ref,
                            *, W, C, n_chunks, chunk_lanes):
    """One block of `block_imgs` images (same subnet) per grid step.

    sid_ref  : (num_blocks,) int32  SMEM  (scalar prefetch; used by index_maps)
    scale_ref: (num_blocks,) f32    SMEM  per-block residual scale
    mask_ref : (9, 1, Lc)    f32    VMEM  resident 0/1 tap-validity masks
    x_ref    : (1, C, L)     bf16   VMEM  block: channels x flattened pixels
    w1_ref   : (1, C, 9*C)   bf16   VMEM  conv1 weights, (c_out, (ky, kx, c_in))
    b1_ref   : (1, C, 1)     f32    VMEM
    w2_ref   : (1, C, 9*C)   bf16   VMEM  conv2 weights
    b2_ref   : (1, C, 1)     f32    VMEM
    out_ref  : (1, C, L)     f32    VMEM
    """
    del sid_ref  # consumed by the index_maps only
    Lc = chunk_lanes

    scale = scale_ref[pl.program_id(0)]          # per-block res_scale (scalar)
    w1 = w1_ref[0]                               # (C, 9C) bf16, hoisted per block
    b1 = b1_ref[0]                               # (C, 1)  f32
    w2 = w2_ref[0]
    b2 = b2_ref[0]

    def conv3x3(inp):
        """im2col for a same-padded 3x3 conv on a (C, Lc) f32 chunk -> (9C, Lc) bf16."""
        pats = []
        for t, (dy, dx) in enumerate(_TAPS):
            off = dy * W + dx
            # patch[p] = inp[p + off]  ->  lane roll by (-off) mod Lc (XLU slot).
            p = pltpu.roll(inp, (-off) % Lc, 1) if off else inp
            if off:
                # Precomputed (1, Lc) 0/1 mask zeroes the "same"-padding border
                # pixels AND any roll wraparound across image/chunk boundaries.
                p = p * mask_ref[t]
            pats.append(p)
        return jnp.concatenate(pats, axis=0).astype(jnp.bfloat16)

    # Static unroll over lane chunks; each chunk is a whole number of images.
    for c in range(n_chunks):
        sl = slice(c * Lc, (c + 1) * Lc)
        x = x_ref[0, :, sl].astype(jnp.float32)                    # (C, Lc)
        y = jnp.dot(w1, conv3x3(x), preferred_element_type=jnp.float32) + b1
        y = jnp.maximum(y, 0.0)                                    # body_0: conv+ReLU
        z = jnp.dot(w2, conv3x3(y), preferred_element_type=jnp.float32) + b2
        out_ref[0, :, sl] = z * scale + x                          # body_1: *scale + residual


def h_fused_resblock_forward(xs, params, res_scales, *, block_imgs=4, chunk_imgs=2):
    """hFusedResBlock.forward: list of NCHW tensors in, list out.

    All subnets are horizontally fused into ONE pallas_call over image blocks;
    the per-block subnet-id table selects each subnet's weights via index_maps.
    """
    n_sub = len(xs)
    assert n_sub == len(params) == len(res_scales)
    _, C, H, W = xs[0].shape
    for x in xs:
        assert x.shape[1:] == (C, H, W), "all subnets must share (C, H, W)"
    HW = H * W
    Bt = int(block_imgs)
    chunk_imgs = max(1, min(int(chunk_imgs), Bt))
    assert Bt % chunk_imgs == 0, "chunk_imgs must divide block_imgs"
    Lc = chunk_imgs * HW                  # lanes per in-kernel chunk
    n_chunks = Bt // chunk_imgs
    L = Bt * HW                           # lanes per block (keep multiple of 128)

    # ---- pack per-subnet batches into lane-dense blocks of Bt images (bf16) ----
    x_blocks, sid_list, scale_list, nblocks = [], [], [], []
    for i, (x, s) in enumerate(zip(xs, res_scales)):
        b = int(x.shape[0])
        nb = -(-b // Bt)                  # cdiv
        pad = nb * Bt - b
        xb = x.reshape(b, C, HW).astype(jnp.bfloat16)
        if pad:
            xb = jnp.concatenate([xb, jnp.zeros((pad, C, HW), xb.dtype)], axis=0)
        # (nb, Bt, C, HW) -> (nb, C, Bt, HW) -> (nb, C, Bt*HW): lane-dense block.
        xb = xb.reshape(nb, Bt, C, HW).transpose(0, 2, 1, 3).reshape(nb, C, L)
        x_blocks.append(xb)
        sid_list.append(jnp.full((nb,), i, jnp.int32))
        scale_list.append(jnp.full((nb,), float(s), jnp.float32))
        nblocks.append(nb)
    x_all = jnp.concatenate(x_blocks, axis=0)         # (num_blocks, C, L) bf16
    sid = jnp.concatenate(sid_list)                   # (num_blocks,) int32
    scales = jnp.concatenate(scale_list)              # (num_blocks,) f32
    num_blocks = int(sid.shape[0])

    # ---- per-subnet weights: torch OIHW -> (C_out, 9*C_in) bf16, (ky,kx,cin) ----
    def pack_w(w):
        o, ci, kh, kw = w.shape
        return jnp.transpose(w, (0, 2, 3, 1)).reshape(o, kh * kw * ci).astype(jnp.bfloat16)

    w1_all = jnp.stack([pack_w(p[0]) for p in params], axis=0)              # (n, C, 9C)
    b1_all = jnp.stack([p[1].reshape(C, 1) for p in params], axis=0).astype(jnp.float32)
    w2_all = jnp.stack([pack_w(p[2]) for p in params], axis=0)
    b2_all = jnp.stack([p[3].reshape(C, 1) for p in params], axis=0).astype(jnp.float32)

    # ---- hoisted border masks: (9, 1, Lc) 0/1 f32, computed once on host ----
    pix = np.arange(HW)
    row, col = pix // W, pix % W
    mask_np = np.empty((9, 1, Lc), np.float32)
    for t, (dy, dx) in enumerate(_TAPS):
        valid = ((row + dy >= 0) & (row + dy < H) &
                 (col + dx >= 0) & (col + dx < W)).astype(np.float32)
        mask_np[t, 0] = np.tile(valid, chunk_imgs)    # same per-image pattern per chunk
    masks = jnp.asarray(mask_np)

    kernel = functools.partial(_hfused_resblock_kernel, W=W, C=C,
                               n_chunks=n_chunks, chunk_lanes=Lc)

    out_all = pl.pallas_call(
        kernel,
        out_shape=jax.ShapeDtypeStruct((num_blocks, C, L), jnp.float32),
        grid_spec=pltpu.PrefetchScalarGridSpec(
            num_scalar_prefetch=1,                                          # sid
            grid=(num_blocks,),
            in_specs=[
                pl.BlockSpec(memory_space=pltpu.MemorySpace.SMEM),          # scales
                pl.BlockSpec((9, 1, Lc), lambda b, sid: (0, 0, 0)),         # masks (resident)
                pl.BlockSpec((1, C, L), lambda b, sid: (b, 0, 0)),          # x block
                pl.BlockSpec((1, C, 9 * C), lambda b, sid: (sid[b], 0, 0)), # w1
                pl.BlockSpec((1, C, 1), lambda b, sid: (sid[b], 0, 0)),     # b1
                pl.BlockSpec((1, C, 9 * C), lambda b, sid: (sid[b], 0, 0)), # w2
                pl.BlockSpec((1, C, 1), lambda b, sid: (sid[b], 0, 0)),     # b2
            ],
            out_specs=pl.BlockSpec((1, C, L), lambda b, sid: (b, 0, 0)),
        ),
        compiler_params=pltpu.CompilerParams(
            dimension_semantics=("parallel",)),      # shardable across v7x's 2 TCs
    )(sid, scales, masks, x_all, w1_all, b1_all, w2_all, b2_all)

    # ---- unpack blocks back into the per-subnet NCHW list (drop batch padding) ----
    outs, off = [], 0
    for i, x in enumerate(xs):
        b = int(x.shape[0])
        nb = nblocks[i]
        o = out_all[off:off + nb].reshape(nb, C, Bt, HW).transpose(0, 2, 1, 3)
        outs.append(o.reshape(nb * Bt, C, H, W)[:b])
        off += nb
    return outs


# ----------------------------- reference (pure JAX) --------------------------
def _ref_resblock(x, w1, b1, w2, b2, res_scale):
    dn = ('NCHW', 'OIHW', 'NCHW')
    y = jax.lax.conv_general_dilated(x, w1, (1, 1), 'SAME',
                                     dimension_numbers=dn,
                                     precision=jax.lax.Precision.HIGHEST)
    y = jnp.maximum(y + b1[None, :, None, None], 0.0)
    z = jax.lax.conv_general_dilated(y, w2, (1, 1), 'SAME',
                                     dimension_numbers=dn,
                                     precision=jax.lax.Precision.HIGHEST)
    z = z + b2[None, :, None, None]
    return z * res_scale + x


if __name__ == "__main__":
    key = jax.random.PRNGKey(0)

    n_feats = 8
    H = W = 16
    subnet_bs = [5, 8]          # per-subnet batch sizes (horizontal fusion)
    res_scales = [1.0, 0.1]

    params, xs = [], []
    for bsz in subnet_bs:
        key, k1, k2, k3, k4, kx = jax.random.split(key, 6)
        w1 = 0.1 * jax.random.normal(k1, (n_feats, n_feats, 3, 3), jnp.float32)
        b1 = 0.1 * jax.random.normal(k2, (n_feats,), jnp.float32)
        w2 = 0.1 * jax.random.normal(k3, (n_feats, n_feats, 3, 3), jnp.float32)
        b2 = 0.1 * jax.random.normal(k4, (n_feats,), jnp.float32)
        params.append((w1, b1, w2, b2))
        xs.append(jax.random.normal(kx, (bsz, n_feats, H, W), jnp.float32))

    # 4 blocks total (2 per subnet): balanced across v7x's two TensorCores.
    outs = h_fused_resblock_forward(xs, params, res_scales,
                                    block_imgs=4, chunk_imgs=2)
    outs = [jax.block_until_ready(o) for o in outs]

    # Correctness vs pure-JAX f32 reference (kernel: bf16 MXU + bf16 HBM acts,
    # f32 accumulation -> ~1e-2 absolute agreement at unit-scale inputs).
    for x, (w1, b1, w2, b2), s, o in zip(xs, params, res_scales, outs):
        ref = _ref_resblock(x, w1, b1, w2, b2, s)
        assert o.shape == x.shape and o.dtype == jnp.float32
        err = float(jnp.max(jnp.abs(o - ref)))
        assert jnp.allclose(o, ref, atol=3e-2, rtol=3e-2), err

    print("KERNEL_OK")
</pallas_src>

<mosaic_0001>
module attributes {stable_mosaic.version = 11 : i64} {
  func.func @_hfused_resblock_kernel(%arg0: i32, %arg1: memref<4xi32, #tpu.memory_space<smem>>, %arg2: memref<4xf32, #tpu.memory_space<smem>>, %arg3: memref<9x1x512xf32, #tpu.memory_space<vmem>>, %arg4: memref<1x8x1024xbf16, #tpu.memory_space<vmem>>, %arg5: memref<1x8x72xbf16, #tpu.memory_space<vmem>>, %arg6: memref<1x8x1xf32, #tpu.memory_space<vmem>>, %arg7: memref<1x8x72xbf16, #tpu.memory_space<vmem>>, %arg8: memref<1x8x1xf32, #tpu.memory_space<vmem>>, %arg9: memref<1x8x1024xf32, #tpu.memory_space<vmem>>) attributes {dimension_semantics = [#tpu.dimension_semantics<parallel>], iteration_bounds = array<i64: 4>, scalar_prefetch = 1 : i64, scratch_operands = 0 : i64, tpu.core_type = #tpu.core_type<tc>, window_params = [{transform_indices = @transform_0, window_bounds = array<i64: 4>}, {pipeline_mode = #tpu.pipeline_mode<synchronous>, transform_indices = @transform_1, window_bounds = array<i64: 9, 1, 512>}, {transform_indices = @transform_2, window_bounds = array<i64: 1, 8, 1024>}, {transform_indices = @transform_3, window_bounds = array<i64: 1, 8, 72>}, {transform_indices = @transform_4, window_bounds = array<i64: 1, 8, 1>}, {transform_indices = @transform_5, window_bounds = array<i64: 1, 8, 72>}, {transform_indices = @transform_6, window_bounds = array<i64: 1, 8, 1>}, {transform_indices = @transform_7, window_bounds = array<i64: 1, 8, 1024>}]} {
    %0 = arith.index_cast %arg0 : i32 to index
    %1 = memref.load %arg2[%0] : memref<4xf32, #tpu.memory_space<smem>>
    %c0 = arith.constant 0 : index
    %c0_0 = arith.constant 0 : index
    %c0_1 = arith.constant 0 : index
    %2 = vector.load %arg5[%c0, %c0_0, %c0_1] : memref<1x8x72xbf16, #tpu.memory_space<vmem>>, vector<1x8x72xbf16>
    %3 = vector.shape_cast %2 : vector<1x8x72xbf16> to vector<8x72xbf16>
    %c0_2 = arith.constant 0 : index
    %c0_3 = arith.constant 0 : index
    %c0_4 = arith.constant 0 : index
    %4 = vector.load %arg6[%c0_2, %c0_3, %c0_4] : memref<1x8x1xf32, #tpu.memory_space<vmem>>, vector<1x8x1xf32>
    %5 = vector.shape_cast %4 : vector<1x8x1xf32> to vector<8x1xf32>
    %c0_5 = arith.constant 0 : index
    %c0_6 = arith.constant 0 : index
    %c0_7 = arith.constant 0 : index
    %6 = vector.load %arg7[%c0_5, %c0_6, %c0_7] : memref<1x8x72xbf16, #tpu.memory_space<vmem>>, vector<1x8x72xbf16>
    %7 = vector.shape_cast %6 : vector<1x8x72xbf16> to vector<8x72xbf16>
    %c0_8 = arith.constant 0 : index
    %c0_9 = arith.constant 0 : index
    %c0_10 = arith.constant 0 : index
    %8 = vector.load %arg8[%c0_8, %c0_9, %c0_10] : memref<1x8x1xf32, #tpu.memory_space<vmem>>, vector<1x8x1xf32>
    %9 = vector.shape_cast %8 : vector<1x8x1xf32> to vector<8x1xf32>
    %c0_11 = arith.constant 0 : index
    %c0_12 = arith.constant 0 : index
    %c0_13 = arith.constant 0 : index
    %10 = vector.load %arg4[%c0_11, %c0_12, %c0_13] : memref<1x8x1024xbf16, #tpu.memory_space<vmem>>, vector<1x8x512xbf16>
    %11 = vector.shape_cast %10 : vector<1x8x512xbf16> to vector<8x512xbf16>
    %12 = arith.extf %11 : vector<8x512xbf16> to vector<8x512xf32>
    %c17_i32 = arith.constant 17 : i32
    %13 = tpu.dynamic_rotate %12 by %c17_i32 dim 1 : vector<8x512xf32>, i32 -> vector<8x512xf32>
    %c0_14 = arith.constant 0 : index
    %c0_15 = arith.constant 0 : index
    %c0_16 = arith.constant 0 : index
    %14 = vector.load %arg3[%c0_14, %c0_15, %c0_16] : memref<9x1x512xf32, #tpu.memory_space<vmem>>, vector<1x1x512xf32>
    %15 = vector.shape_cast %14 : vector<1x1x512xf32> to vector<1x512xf32>
    %16 = vector.broadcast %15 : vector<1x512xf32> to vector<8x512xf32>
    %17 = arith.mulf %13, %16 : vector<8x512xf32>
    %c16_i32 = arith.constant 16 : i32
    %18 = tpu.dynamic_rotate %12 by %c16_i32 dim 1 : vector<8x512xf32>, i32 -> vector<8x512xf32>
    %c1 = arith.constant 1 : index
    %c0_17 = arith.constant 0 : index
    %c0_18 = arith.constant 0 : index
    %19 = vector.load %arg3[%c1, %c0_17, %c0_18] : memref<9x1x512xf32, #tpu.memory_space<vmem>>, vector<1x1x512xf32>
    %20 = vector.shape_cast %19 : vector<1x1x512xf32> to vector<1x512xf32>
    %21 = vector.broadcast %20 : vector<1x512xf32> to vector<8x512xf32>
    %22 = arith.mulf %18, %21 : vector<8x512xf32>
    %c15_i32 = arith.constant 15 : i32
    %23 = tpu.dynamic_rotate %12 by %c15_i32 dim 1 : vector<8x512xf32>, i32 -> vector<8x512xf32>
    %c2 = arith.constant 2 : index
    %c0_19 = arith.constant 0 : index
    %c0_20 = arith.constant 0 : index
    %24 = vector.load %arg3[%c2, %c0_19, %c0_20] : memref<9x1x512xf32, #tpu.memory_space<vmem>>, vector<1x1x512xf32>
    %25 = vector.shape_cast %24 : vector<1x1x512xf32> to vector<1x512xf32>
    %26 = vector.broadcast %25 : vector<1x512xf32> to vector<8x512xf32>
    %27 = arith.mulf %23, %26 : vector<8x512xf32>
    %c1_i32 = arith.constant 1 : i32
    %28 = tpu.dynamic_rotate %12 by %c1_i32 dim 1 : vector<8x512xf32>, i32 -> vector<8x512xf32>
    %c3 = arith.constant 3 : index
    %c0_21 = arith.constant 0 : index
    %c0_22 = arith.constant 0 : index
    %29 = vector.load %arg3[%c3, %c0_21, %c0_22] : memref<9x1x512xf32, #tpu.memory_space<vmem>>, vector<1x1x512xf32>
    %30 = vector.shape_cast %29 : vector<1x1x512xf32> to vector<1x512xf32>
    %31 = vector.broadcast %30 : vector<1x512xf32> to vector<8x512xf32>
    %32 = arith.mulf %28, %31 : vector<8x512xf32>
    %c511_i32 = arith.constant 511 : i32
    %33 = tpu.dynamic_rotate %12 by %c511_i32 dim 1 : vector<8x512xf32>, i32 -> vector<8x512xf32>
    %c5 = arith.constant 5 : index
    %c0_23 = arith.constant 0 : index
    %c0_24 = arith.constant 0 : index
    %34 = vector.load %arg3[%c5, %c0_23, %c0_24] : memref<9x1x512xf32, #tpu.memory_space<vmem>>, vector<1x1x512xf32>
    %35 = vector.shape_cast %34 : vector<1x1x512xf32> to vector<1x512xf32>
    %36 = vector.broadcast %35 : vector<1x512xf32> to vector<8x512xf32>
    %37 = arith.mulf %33, %36 : vector<8x512xf32>
    %c497_i32 = arith.constant 497 : i32
    %38 = tpu.dynamic_rotate %12 by %c497_i32 dim 1 : vector<8x512xf32>, i32 -> vector<8x512xf32>
    %c6 = arith.constant 6 : index
    %c0_25 = arith.constant 0 : index
    %c0_26 = arith.constant 0 : index
    %39 = vector.load %arg3[%c6, %c0_25, %c0_26] : memref<9x1x512xf32, #tpu.memory_space<vmem>>, vector<1x1x512xf32>
    %40 = vector.shape_cast %39 : vector<1x1x512xf32> to vector<1x512xf32>
    %41 = vector.broadcast %40 : vector<1x512xf32> to vector<8x512xf32>
    %42 = arith.mulf %38, %41 : vector<8x512xf32>
    %c496_i32 = arith.constant 496 : i32
    %43 = tpu.dynamic_rotate %12 by %c496_i32 dim 1 : vector<8x512xf32>, i32 -> vector<8x512xf32>
    %c7 = arith.constant 7 : index
    %c0_27 = arith.constant 0 : index
    %c0_28 = arith.constant 0 : index
    %44 = vector.load %arg3[%c7, %c0_27, %c0_28] : memref<9x1x512xf32, #tpu.memory_space<vmem>>, vector<1x1x512xf32>
    %45 = vector.shape_cast %44 : vector<1x1x512xf32> to vector<1x512xf32>
    %46 = vector.broadcast %45 : vector<1x512xf32> to vector<8x512xf32>
    %47 = arith.mulf %43, %46 : vector<8x512xf32>
    %c495_i32 = arith.constant 495 : i32
    %48 = tpu.dynamic_rotate %12 by %c495_i32 dim 1 : vector<8x512xf32>, i32 -> vector<8x512xf32>
    %c8 = arith.constant 8 : index
    %c0_29 = arith.constant 0 : index
    %c0_30 = arith.constant 0 : index
    %49 = vector.load %arg3[%c8, %c0_29, %c0_30] : memref<9x1x512xf32, #tpu.memory_space<vmem>>, vector<1x1x512xf32>
    %50 = vector.shape_cast %49 : vector<1x1x512xf32> to vector<1x512xf32>
    %51 = vector.broadcast %50 : vector<1x512xf32> to vector<8x512xf32>
    %52 = arith.mulf %48, %51 : vector<8x512xf32>
    %53 = tpu.concatenate %17, %22, %27, %32, %12, %37, %42, %47, %52 in 0 : vector<8x512xf32>, vector<8x512xf32>, vector<8x512xf32>, vector<8x512xf32>, vector<8x512xf32>, vector<8x512xf32>, vector<8x512xf32>, vector<8x512xf32>, vector<8x512xf32> -> vector<72x512xf32>
    %54 = arith.truncf %53 : vector<72x512xf32> to vector<72x512xbf16>
    %cst = arith.constant dense<0.000000e+00> : vector<8x512xf32>
    %55 = tpu.matmul %3, %54, %cst {dimension_numbers = #tpu.dot_dimension_numbers<[1], [0], [0], [1], [0, 0, 1, 1], [], []>} : vector<8x72xbf16>, vector<72x512xbf16>, vector<8x512xf32> -> vector<8x512xf32>
    %56 = vector.broadcast %5 : vector<8x1xf32> to vector<8x512xf32>
    %57 = arith.addf %55, %56 : vector<8x512xf32>
    %cst_31 = arith.constant 0.000000e+00 : f32
    %58 = vector.broadcast %cst_31 : f32 to vector<8x512xf32>
    %59 = arith.maximumf %57, %58 : vector<8x512xf32>
    %c17_i32_32 = arith.constant 17 : i32
    %60 = tpu.dynamic_rotate %59 by %c17_i32_32 dim 1 : vector<8x512xf32>, i32 -> vector<8x512xf32>
    %c0_33 = arith.constant 0 : index
    %c0_34 = arith.constant 0 : index
    %c0_35 = arith.constant 0 : index
    %61 = vector.load %arg3[%c0_33, %c0_34, %c0_35] : memref<9x1x512xf32, #tpu.memory_space<vmem>>, vector<1x1x512xf32>
    %62 = vector.shape_cast %61 : vector<1x1x512xf32> to vector<1x512xf32>
    %63 = vector.broadcast %62 : vector<1x512xf32> to vector<8x512xf32>
    %64 = arith.mulf %60, %63 : vector<8x512xf32>
    %c16_i32_36 = arith.constant 16 : i32
    %65 = tpu.dynamic_rotate %59 by %c16_i32_36 dim 1 : vector<8x512xf32>, i32 -> vector<8x512xf32>
    %c1_37 = arith.constant 1 : index
    %c0_38 = arith.constant 0 : index
    %c0_39 = arith.constant 0 : index
    %66 = vector.load %arg3[%c1_37, %c0_38, %c0_39] : memref<9x1x512xf32, #tpu.memory_space<vmem>>, vector<1x1x512xf32>
    %67 = vector.shape_cast %66 : vector<1x1x512xf32> to vector<1x512xf32>
    %68 = vector.broadcast %67 : vector<1x512xf32> to vector<8x512xf32>
    %69 = arith.mulf %65, %68 : vector<8x512xf32>
    %c15_i32_40 = arith.constant 15 : i32
    %70 = tpu.dynamic_rotate %59 by %c15_i32_40 dim 1 : vector<8x512xf32>, i32 -> vector<8x512xf32>
    %c2_41 = arith.constant 2 : index
    %c0_42 = arith.constant 0 : index
    %c0_43 = arith.constant 0 : index
    %71 = vector.load %arg3[%c2_41, %c0_42, %c0_43] : memref<9x1x512xf32, #tpu.memory_space<vmem>>, vector<1x1x512xf32>
    %72 = vector.shape_cast %71 : vector<1x1x512xf32> to vector<1x512xf32>
    %73 = vector.broadcast %72 : vector<1x512xf32> to vector<8x512xf32>
    %74 = arith.mulf %70, %73 : vector<8x512xf32>
    %c1_i32_44 = arith.constant 1 : i32
    %75 = tpu.dynamic_rotate %59 by %c1_i32_44 dim 1 : vector<8x512xf32>, i32 -> vector<8x512xf32>
    %c3_45 = arith.constant 3 : index
    %c0_46 = arith.constant 0 : index
    %c0_47 = arith.constant 0 : index
    %76 = vector.load %arg3[%c3_45, %c0_46, %c0_47] : memref<9x1x512xf32, #tpu.memory_space<vmem>>, vector<1x1x512xf32>
    %77 = vector.shape_cast %76 : vector<1x1x512xf32> to vector<1x512xf32>
    %78 = vector.broadcast %77 : vector<1x512xf32> to vector<8x512xf32>
    %79 = arith.mulf %75, %78 : vector<8x512xf32>
    %c511_i32_48 = arith.constant 511 : i32
    %80 = tpu.dynamic_rotate %59 by %c511_i32_48 dim 1 : vector<8x512xf32>, i32 -> vector<8x512xf32>
    %c5_49 = arith.constant 5 : index
    %c0_50 = arith.constant 0 : index
    %c0_51 = arith.constant 0 : index
    %81 = vector.load %arg3[%c5_49, %c0_50, %c0_51] : memref<9x1x512xf32, #tpu.memory_space<vmem>>, vector<1x1x512xf32>
    %82 = vector.shape_cast %81 : vector<1x1x512xf32> to vector<1x512xf32>
    %83 = vector.broadcast %82 : vector<1x512xf32> to vector<8x512xf32>
    %84 = arith.mulf %80, %83 : vector<8x512xf32>
    %c497_i32_52 = arith.constant 497 : i32
    %85 = tpu.dynamic_rotate %59 by %c497_i32_52 dim 1 : vector<8x512xf32>, i32 -> vector<8x512xf32>
    %c6_53 = arith.constant 6 : index
    %c0_54 = arith.constant 0 : index
    %c0_55 = arith.constant 0 : index
    %86 = vector.load %arg3[%c6_53, %c0_54, %c0_55] : memref<9x1x512xf32, #tpu.memory_space<vmem>>, vector<1x1x512xf32>
    %87 = vector.shape_cast %86 : vector<1x1x512xf32> to vector<1x512xf32>
    %88 = vector.broadcast %87 : vector<1x512xf32> to vector<8x512xf32>
    %89 = arith.mulf %85, %88 : vector<8x512xf32>
    %c496_i32_56 = arith.constant 496 : i32
    %90 = tpu.dynamic_rotate %59 by %c496_i32_56 dim 1 : vector<8x512xf32>, i32 -> vector<8x512xf32>
    %c7_57 = arith.constant 7 : index
    %c0_58 = arith.constant 0 : index
    %c0_59 = arith.constant 0 : index
    %91 = vector.load %arg3[%c7_57, %c0_58, %c0_59] : memref<9x1x512xf32, #tpu.memory_space<vmem>>, vector<1x1x512xf32>
    %92 = vector.shape_cast %91 : vector<1x1x512xf32> to vector<1x512xf32>
    %93 = vector.broadcast %92 : vector<1x512xf32> to vector<8x512xf32>
    %94 = arith.mulf %90, %93 : vector<8x512xf32>
    %c495_i32_60 = arith.constant 495 : i32
    %95 = tpu.dynamic_rotate %59 by %c495_i32_60 dim 1 : vector<8x512xf32>, i32 -> vector<8x512xf32>
    %c8_61 = arith.constant 8 : index
    %c0_62 = arith.constant 0 : index
    %c0_63 = arith.constant 0 : index
    %96 = vector.load %arg3[%c8_61, %c0_62, %c0_63] : memref<9x1x512xf32, #tpu.memory_space<vmem>>, vector<1x1x512xf32>
    %97 = vector.shape_cast %96 : vector<1x1x512xf32> to vector<1x512xf32>
    %98 = vector.broadcast %97 : vector<1x512xf32> to vector<8x512xf32>
    %99 = arith.mulf %95, %98 : vector<8x512xf32>
    %100 = tpu.concatenate %64, %69, %74, %79, %59, %84, %89, %94, %99 in 0 : vector<8x512xf32>, vector<8x512xf32>, vector<8x512xf32>, vector<8x512xf32>, vector<8x512xf32>, vector<8x512xf32>, vector<8x512xf32>, vector<8x512xf32>, vector<8x512xf32> -> vector<72x512xf32>
    %101 = arith.truncf %100 : vector<72x512xf32> to vector<72x512xbf16>
    %cst_64 = arith.constant dense<0.000000e+00> : vector<8x512xf32>
    %102 = tpu.matmul %7, %101, %cst_64 {dimension_numbers = #tpu.dot_dimension_numbers<[1], [0], [0], [1], [0, 0, 1, 1], [], []>} : vector<8x72xbf16>, vector<72x512xbf16>, vector<8x512xf32> -> vector<8x512xf32>
    %103 = vector.broadcast %9 : vector<8x1xf32> to vector<8x512xf32>
    %104 = arith.addf %102, %103 : vector<8x512xf32>
    %105 = vector.broadcast %1 : f32 to vector<8x512xf32>
    %106 = arith.mulf %104, %105 : vector<8x512xf32>
    %107 = arith.addf %106, %12 : vector<8x512xf32>
    %c0_65 = arith.constant 0 : index
    %c0_66 = arith.constant 0 : index
    %c0_67 = arith.constant 0 : index
    %108 = vector.load %arg9[%c0_65, %c0_66, %c0_67] : memref<1x8x1024xf32, #tpu.memory_space<vmem>>, vector<1x8x512xf32>
    %109 = vector.shape_cast %108 : vector<1x8x512xf32> to vector<8x512xf32>
    %110 = vector.shape_cast %107 : vector<8x512xf32> to vector<1x8x512xf32>
    tpu.vector_store %arg9[%c0_65, %c0_66, %c0_67], %110 {strides = array<i32>} : memref<1x8x1024xf32, #tpu.memory_space<vmem>>, vector<1x8x512xf32>,
    %c0_68 = arith.constant 0 : index
    %c0_69 = arith.constant 0 : index
    %c512 = arith.constant 512 : index
    %111 = vector.load %arg4[%c0_68, %c0_69, %c512] : memref<1x8x1024xbf16, #tpu.memory_space<vmem>>, vector<1x8x512xbf16>
    %112 = vector.shape_cast %111 : vector<1x8x512xbf16> to vector<8x512xbf16>
    %113 = arith.extf %112 : vector<8x512xbf16> to vector<8x512xf32>
    %c17_i32_70 = arith.constant 17 : i32
    %114 = tpu.dynamic_rotate %113 by %c17_i32_70 dim 1 : vector<8x512xf32>, i32 -> vector<8x512xf32>
    %c0_71 = arith.constant 0 : index
    %c0_72 = arith.constant 0 : index
    %c0_73 = arith.constant 0 : index
    %115 = vector.load %arg3[%c0_71, %c0_72, %c0_73] : memref<9x1x512xf32, #tpu.memory_space<vmem>>, vector<1x1x512xf32>
    %116 = vector.shape_cast %115 : vector<1x1x512xf32> to vector<1x512xf32>
    %117 = vector.broadcast %116 : vector<1x512xf32> to vector<8x512xf32>
    %118 = arith.mulf %114, %117 : vector<8x512xf32>
    %c16_i32_74 = arith.constant 16 : i32
    %119 = tpu.dynamic_rotate %113 by %c16_i32_74 dim 1 : vector<8x512xf32>, i32 -> vector<8x512xf32>
    %c1_75 = arith.constant 1 : index
    %c0_76 = arith.constant 0 : index
    %c0_77 = arith.constant 0 : index
    %120 = vector.load %arg3[%c1_75, %c0_76, %c0_77] : memref<9x1x512xf32, #tpu.memory_space<vmem>>, vector<1x1x512xf32>
    %121 = vector.shape_cast %120 : vector<1x1x512xf32> to vector<1x512xf32>
    %122 = vector.broadcast %121 : vector<1x512xf32> to vector<8x512xf32>
    %123 = arith.mulf %119, %122 : vector<8x512xf32>
    %c15_i32_78 = arith.constant 15 : i32
    %124 = tpu.dynamic_rotate %113 by %c15_i32_78 dim 1 : vector<8x512xf32>, i32 -> vector<8x512xf32>
    %c2_79 = arith.constant 2 : index
    %c0_80 = arith.constant 0 : index
    %c0_81 = arith.constant 0 : index
    %125 = vector.load %arg3[%c2_79, %c0_80, %c0_81] : memref<9x1x512xf32, #tpu.memory_space<vmem>>, vector<1x1x512xf32>
    %126 = vector.shape_cast %125 : vector<1x1x512xf32> to vector<1x512xf32>
    %127 = vector.broadcast %126 : vector<1x512xf32> to vector<8x512xf32>
    %128 = arith.mulf %124, %127 : vector<8x512xf32>
    %c1_i32_82 = arith.constant 1 : i32
    %129 = tpu.dynamic_rotate %113 by %c1_i32_82 dim 1 : vector<8x512xf32>, i32 -> vector<8x512xf32>
    %c3_83 = arith.constant 3 : index
    %c0_84 = arith.constant 0 : index
    %c0_85 = arith.constant 0 : index
    %130 = vector.load %arg3[%c3_83, %c0_84, %c0_85] : memref<9x1x512xf32, #tpu.memory_space<vmem>>, vector<1x1x512xf32>
    %131 = vector.shape_cast %130 : vector<1x1x512xf32> to vector<1x512xf32>
    %132 = vector.broadcast %131 : vector<1x512xf32> to vector<8x512xf32>
    %133 = arith.mulf %129, %132 : vector<8x512xf32>
    %c511_i32_86 = arith.constant 511 : i32
    %134 = tpu.dynamic_rotate %113 by %c511_i32_86 dim 1 : vector<8x512xf32>, i32 -> vector<8x512xf32>
    %c5_87 = arith.constant 5 : index
    %c0_88 = arith.constant 0 : index
    %c0_89 = arith.constant 0 : index
    %135 = vector.load %arg3[%c5_87, %c0_88, %c0_89] : memref<9x1x512xf32, #tpu.memory_space<vmem>>, vector<1x1x512xf32>
    %136 = vector.shape_cast %135 : vector<1x1x512xf32> to vector<1x512xf32>
    %137 = vector.broadcast %136 : vector<1x512xf32> to vector<8x512xf32>
    %138 = arith.mulf %134, %137 : vector<8x512xf32>
    %c497_i32_90 = arith.constant 497 : i32
    %139 = tpu.dynamic_rotate %113 by %c497_i32_90 dim 1 : vector<8x512xf32>, i32 -> vector<8x512xf32>
    %c6_91 = arith.constant 6 : index
    %c0_92 = arith.constant 0 : index
    %c0_93 = arith.constant 0 : index
    %140 = vector.load %arg3[%c6_91, %c0_92, %c0_93] : memref<9x1x512xf32, #tpu.memory_space<vmem>>, vector<1x1x512xf32>
    %141 = vector.shape_cast %140 : vector<1x1x512xf32> to vector<1x512xf32>
    %142 = vector.broadcast %141 : vector<1x512xf32> to vector<8x512xf32>
    %143 = arith.mulf %139, %142 : vector<8x512xf32>
    %c496_i32_94 = arith.constant 496 : i32
    %144 = tpu.dynamic_rotate %113 by %c496_i32_94 dim 1 : vector<8x512xf32>, i32 -> vector<8x512xf32>
    %c7_95 = arith.constant 7 : index
    %c0_96 = arith.constant 0 : index
    %c0_97 = arith.constant 0 : index
    %145 = vector.load %arg3[%c7_95, %c0_96, %c0_97] : memref<9x1x512xf32, #tpu.memory_space<vmem>>, vector<1x1x512xf32>
    %146 = vector.shape_cast %145 : vector<1x1x512xf32> to vector<1x512xf32>
    %147 = vector.broadcast %146 : vector<1x512xf32> to vector<8x512xf32>
    %148 = arith.mulf %144, %147 : vector<8x512xf32>
    %c495_i32_98 = arith.constant 495 : i32
    %149 = tpu.dynamic_rotate %113 by %c495_i32_98 dim 1 : vector<8x512xf32>, i32 -> vector<8x512xf32>
    %c8_99 = arith.constant 8 : index
    %c0_100 = arith.constant 0 : index
    %c0_101 = arith.constant 0 : index
    %150 = vector.load %arg3[%c8_99, %c0_100, %c0_101] : memref<9x1x512xf32, #tpu.memory_space<vmem>>, vector<1x1x512xf32>
    %151 = vector.shape_cast %150 : vector<1x1x512xf32> to vector<1x512xf32>
    %152 = vector.broadcast %151 : vector<1x512xf32> to vector<8x512xf32>
    %153 = arith.mulf %149, %152 : vector<8x512xf32>
    %154 = tpu.concatenate %118, %123, %128, %133, %113, %138, %143, %148, %153 in 0 : vector<8x512xf32>, vector<8x512xf32>, vector<8x512xf32>, vector<8x512xf32>, vector<8x512xf32>, vector<8x512xf32>, vector<8x512xf32>, vector<8x512xf32>, vector<8x512xf32> -> vector<72x512xf32>
    %155 = arith.truncf %154 : vector<72x512xf32> to vector<72x512xbf16>
    %cst_102 = arith.constant dense<0.000000e+00> : vector<8x512xf32>
    %156 = tpu.matmul %3, %155, %cst_102 {dimension_numbers = #tpu.dot_dimension_numbers<[1], [0], [0], [1], [0, 0, 1, 1], [], []>} : vector<8x72xbf16>, vector<72x512xbf16>, vector<8x512xf32> -> vector<8x512xf32>
    %157 = vector.broadcast %5 : vector<8x1xf32> to vector<8x512xf32>
    %158 = arith.addf %156, %157 : vector<8x512xf32>
    %cst_103 = arith.constant 0.000000e+00 : f32
    %159 = vector.broadcast %cst_103 : f32 to vector<8x512xf32>
    %160 = arith.maximumf %158, %159 : vector<8x512xf32>
    %c17_i32_104 = arith.constant 17 : i32
    %161 = tpu.dynamic_rotate %160 by %c17_i32_104 dim 1 : vector<8x512xf32>, i32 -> vector<8x512xf32>
    %c0_105 = arith.constant 0 : index
    %c0_106 = arith.constant 0 : index
    %c0_107 = arith.constant 0 : index
    %162 = vector.load %arg3[%c0_105, %c0_106, %c0_107] : memref<9x1x512xf32, #tpu.memory_space<vmem>>, vector<1x1x512xf32>
    %163 = vector.shape_cast %162 : vector<1x1x512xf32> to vector<1x512xf32>
    %164 = vector.broadcast %163 : vector<1x512xf32> to vector<8x512xf32>
    %165 = arith.mulf %161, %164 : vector<8x512xf32>
    %c16_i32_108 = arith.constant 16 : i32
    %166 = tpu.dynamic_rotate %160 by %c16_i32_108 dim 1 : vector<8x512xf32>, i32 -> vector<8x512xf32>
    %c1_109 = arith.constant 1 : index
    %c0_110 = arith.constant 0 : index
    %c0_111 = arith.constant 0 : index
    %167 = vector.load %arg3[%c1_109, %c0_110, %c0_111] : memref<9x1x512xf32, #tpu.memory_space<vmem>>, vector<1x1x512xf32>
    %168 = vector.shape_cast %167 : vector<1x1x512xf32> to vector<1x512xf32>
    %169 = vector.broadcast %168 : vector<1x512xf32> to vector<8x512xf32>
    %170 = arith.mulf %166, %169 : vector<8x512xf32>
    %c15_i32_112 = arith.constant 15 : i32
    %171 = tpu.dynamic_rotate %160 by %c15_i32_112 dim 1 : vector<8x512xf32>, i32 -> vector<8x512xf32>
    %c2_113 = arith.constant 2 : index
    %c0_114 = arith.constant 0 : index
    %c0_115 = arith.constant 0 : index
    %172 = vector.load %arg3[%c2_113, %c0_114, %c0_115] : memref<9x1x512xf32, #tpu.memory_space<vmem>>, vector<1x1x512xf32>
    %173 = vector.shape_cast %172 : vector<1x1x512xf32> to vector<1x512xf32>
    %174 = vector.broadcast %173 : vector<1x512xf32> to vector<8x512xf32>
    %175 = arith.mulf %171, %174 : vector<8x512xf32>
    %c1_i32_116 = arith.constant 1 : i32
    %176 = tpu.dynamic_rotate %160 by %c1_i32_116 dim 1 : vector<8x512xf32>, i32 -> vector<8x512xf32>
    %c3_117 = arith.constant 3 : index
    %c0_118 = arith.constant 0 : index
    %c0_119 = arith.constant 0 : index
    %177 = vector.load %arg3[%c3_117, %c0_118, %c0_119] : memref<9x1x512xf32, #tpu.memory_space<vmem>>, vector<1x1x512xf32>
    %178 = vector.shape_cast %177 : vector<1x1x512xf32> to vector<1x512xf32>
    %179 = vector.broadcast %178 : vector<1x512xf32> to vector<8x512xf32>
    %180 = arith.mulf %176, %179 : vector<8x512xf32>
    %c511_i32_120 = arith.constant 511 : i32
    %181 = tpu.dynamic_rotate %160 by %c511_i32_120 dim 1 : vector<8x512xf32>, i32 -> vector<8x512xf32>
    %c5_121 = arith.constant 5 : index
    %c0_122 = arith.constant 0 : index
    %c0_123 = arith.constant 0 : index
    %182 = vector.load %arg3[%c5_121, %c0_122, %c0_123] : memref<9x1x512xf32, #tpu.memory_space<vmem>>, vector<1x1x512xf32>
    %183 = vector.shape_cast %182 : vector<1x1x512xf32> to vector<1x512xf32>
    %184 = vector.broadcast %183 : vector<1x512xf32> to vector<8x512xf32>
    %185 = arith.mulf %181, %184 : vector<8x512xf32>
    %c497_i32_124 = arith.constant 497 : i32
    %186 = tpu.dynamic_rotate %160 by %c497_i32_124 dim 1 : vector<8x512xf32>, i32 -> vector<8x512xf32>
    %c6_125 = arith.constant 6 : index
    %c0_126 = arith.constant 0 : index
    %c0_127 = arith.constant 0 : index
    %187 = vector.load %arg3[%c6_125, %c0_126, %c0_127] : memref<9x1x512xf32, #tpu.memory_space<vmem>>, vector<1x1x512xf32>
    %188 = vector.shape_cast %187 : vector<1x1x512xf32> to vector<1x512xf32>
    %189 = vector.broadcast %188 : vector<1x512xf32> to vector<8x512xf32>
    %190 = arith.mulf %186, %189 : vector<8x512xf32>
    %c496_i32_128 = arith.constant 496 : i32
    %191 = tpu.dynamic_rotate %160 by %c496_i32_128 dim 1 : vector<8x512xf32>, i32 -> vector<8x512xf32>
    %c7_129 = arith.constant 7 : index
    %c0_130 = arith.constant 0 : index
    %c0_131 = arith.constant 0 : index
    %192 = vector.load %arg3[%c7_129, %c0_130, %c0_131] : memref<9x1x512xf32, #tpu.memory_space<vmem>>, vector<1x1x512xf32>
    %193 = vector.shape_cast %192 : vector<1x1x512xf32> to vector<1x512xf32>
    %194 = vector.broadcast %193 : vector<1x512xf32> to vector<8x512xf32>
    %195 = arith.mulf %191, %194 : vector<8x512xf32>
    %c495_i32_132 = arith.constant 495 : i32
    %196 = tpu.dynamic_rotate %160 by %c495_i32_132 dim 1 : vector<8x512xf32>, i32 -> vector<8x512xf32>
    %c8_133 = arith.constant 8 : index
    %c0_134 = arith.constant 0 : index
    %c0_135 = arith.constant 0 : index
    %197 = vector.load %arg3[%c8_133, %c0_134, %c0_135] : memref<9x1x512xf32, #tpu.memory_space<vmem>>, vector<1x1x512xf32>
    %198 = vector.shape_cast %197 : vector<1x1x512xf32> to vector<1x512xf32>
    %199 = vector.broadcast %198 : vector<1x512xf32> to vector<8x512xf32>
    %200 = arith.mulf %196, %199 : vector<8x512xf32>
    %201 = tpu.concatenate %165, %170, %175, %180, %160, %185, %190, %195, %200 in 0 : vector<8x512xf32>, vector<8x512xf32>, vector<8x512xf32>, vector<8x512xf32>, vector<8x512xf32>, vector<8x512xf32>, vector<8x512xf32>, vector<8x512xf32>, vector<8x512xf32> -> vector<72x512xf32>
    %202 = arith.truncf %201 : vector<72x512xf32> to vector<72x512xbf16>
    %cst_136 = arith.constant dense<0.000000e+00> : vector<8x512xf32>
    %203 = tpu.matmul %7, %202, %cst_136 {dimension_numbers = #tpu.dot_dimension_numbers<[1], [0], [0], [1], [0, 0, 1, 1], [], []>} : vector<8x72xbf16>, vector<72x512xbf16>, vector<8x512xf32> -> vector<8x512xf32>
    %204 = vector.broadcast %9 : vector<8x1xf32> to vector<8x512xf32>
    %205 = arith.addf %203, %204 : vector<8x512xf32>
    %206 = vector.broadcast %1 : f32 to vector<8x512xf32>
    %207 = arith.mulf %205, %206 : vector<8x512xf32>
    %208 = arith.addf %207, %113 : vector<8x512xf32>
    %c0_137 = arith.constant 0 : index
    %c0_138 = arith.constant 0 : index
    %c512_139 = arith.constant 512 : index
    %209 = vector.load %arg9[%c0_137, %c0_138, %c512_139] : memref<1x8x1024xf32, #tpu.memory_space<vmem>>, vector<1x8x512xf32>
    %210 = vector.shape_cast %209 : vector<1x8x512xf32> to vector<8x512xf32>
    %211 = vector.shape_cast %208 : vector<8x512xf32> to vector<1x8x512xf32>
    tpu.vector_store %arg9[%c0_137, %c0_138, %c512_139], %211 {strides = array<i32>} : memref<1x8x1024xf32, #tpu.memory_space<vmem>>, vector<1x8x512xf32>,
    return
  }
  func.func @transform_0(%arg0: i32, %arg1: memref<4xi32, #tpu.memory_space<smem>>) -> i32 {
    %c0_i32 = arith.constant 0 : i32
    %c0_i32_0 = arith.constant 0 : i32
    return %c0_i32 : i32
  }
  func.func @transform_1(%arg0: i32, %arg1: memref<4xi32, #tpu.memory_space<smem>>) -> (i32, i32, i32) {
    %c0_i32 = arith.constant 0 : i32
    %c0_i32_0 = arith.constant 0 : i32
    %c0_i32_1 = arith.constant 0 : i32
    %c0_i32_2 = arith.constant 0 : i32
    return %c0_i32, %c0_i32_0, %c0_i32_1 : i32, i32, i32
  }
  func.func @transform_2(%arg0: i32, %arg1: memref<4xi32, #tpu.memory_space<smem>>) -> (i32, i32, i32) {
    %c0_i32 = arith.constant 0 : i32
    %c0_i32_0 = arith.constant 0 : i32
    %c0_i32_1 = arith.constant 0 : i32
    return %arg0, %c0_i32, %c0_i32_0 : i32, i32, i32
  }
  func.func @transform_3(%arg0: i32, %arg1: memref<4xi32, #tpu.memory_space<smem>>) -> (i32, i32, i32) {
    %0 = arith.index_cast %arg0 : i32 to index
    %1 = memref.load %arg1[%0] : memref<4xi32, #tpu.memory_space<smem>>
    %c0_i32 = arith.constant 0 : i32
    %c0_i32_0 = arith.constant 0 : i32
    %c0_i32_1 = arith.constant 0 : i32
    return %1, %c0_i32, %c0_i32_0 : i32, i32, i32
  }
  func.func @transform_4(%arg0: i32, %arg1: memref<4xi32, #tpu.memory_space<smem>>) -> (i32, i32, i32) {
    %0 = arith.index_cast %arg0 : i32 to index
    %1 = memref.load %arg1[%0] : memref<4xi32, #tpu.memory_space<smem>>
    %c0_i32 = arith.constant 0 : i32
    %c0_i32_0 = arith.constant 0 : i32
    %c0_i32_1 = arith.constant 0 : i32
    return %1, %c0_i32, %c0_i32_0 : i32, i32, i32
  }
  func.func @transform_5(%arg0: i32, %arg1: memref<4xi32, #tpu.memory_space<smem>>) -> (i32, i32, i32) {
    %0 = arith.index_cast %arg0 : i32 to index
    %1 = memref.load %arg1[%0] : memref<4xi32, #tpu.memory_space<smem>>
    %c0_i32 = arith.constant 0 : i32
    %c0_i32_0 = arith.constant 0 : i32
    %c0_i32_1 = arith.constant 0 : i32
    return %1, %c0_i32, %c0_i32_0 : i32, i32, i32
  }
  func.func @transform_6(%arg0: i32, %arg1: memref<4xi32, #tpu.memory_space<smem>>) -> (i32, i32, i32) {
    %0 = arith.index_cast %arg0 : i32 to index
    %1 = memref.load %arg1[%0] : memref<4xi32, #tpu.memory_space<smem>>
    %c0_i32 = arith.constant 0 : i32
    %c0_i32_0 = arith.constant 0 : i32
    %c0_i32_1 = arith.constant 0 : i32
    return %1, %c0_i32, %c0_i32_0 : i32, i32, i32
  }
  func.func @transform_7(%arg0: i32, %arg1: memref<4xi32, #tpu.memory_space<smem>>) -> (i32, i32, i32) {
    %c0_i32 = arith.constant 0 : i32
    %c0_i32_0 = arith.constant 0 : i32
    %c0_i32_1 = arith.constant 0 : i32
    return %arg0, %c0_i32, %c0_i32_0 : i32, i32, i32
  }
}

</mosaic_0001>

<llo_original>
// kernel: tpu_custom_call.1
$region0: #{tpu_custom_call.1}
  #allocation0 [shape = 'u32[]', space=smem, size = 0x4, offset = 0x4, fixed_abs, tag = 'smem constant byte address 0x4 - core index']
  #allocation1 [shape = 'u32[144,128]{1,0:T(1,128)}', space=vmem, size = 0x12000, scoped, tag = 'internal scratch']
  #allocation2 [shape = 's32[1]{0}', space=sflag, size = 0x4, scoped, tag = 'scoped memory for tpu_custom_call.1']
  #allocation3 [shape = 'u8[512]{0}', space=smem, size = 0x200, scoped, tag = 'prefetched SMEM operand 0']
  %s0 = inlined_call_operand.hbm [shape: s32[4], index: 0, kind: input, shape index: {}]
  %s1 = inlined_call_operand.hbm [shape: f32[4], index: 1, kind: input, shape index: {}]
  %s2 = inlined_call_operand.vmem [shape: f32[9,1,512], index: 2, kind: input, shape index: {}]
  %s3 = inlined_call_operand.hbm [shape: bf16[4,8,1024], index: 3, kind: input, shape index: {}]
  %s4 = inlined_call_operand.vmem [shape: bf16[2,8,72], index: 4, kind: input, shape index: {}]
  %s5 = inlined_call_operand.vmem [shape: f32[2,8,1], index: 5, kind: input, shape index: {}]
  %s6 = inlined_call_operand.vmem [shape: bf16[2,8,72], index: 6, kind: input, shape index: {}]
  %s7 = inlined_call_operand.vmem [shape: f32[2,8,1], index: 7, kind: input, shape index: {}]
  %s8 = inlined_call_operand.hbm [shape: f32[4,8,1024], index: 8, kind: output, shape index: {}]
  %s9 = sld [smem:[#allocation0]]
  $region69: #{tpu_custom_call.1} parent=0
    _
  %s11 = ssub.s32 1, %s9
  %s12 = scalar_select 0, %s11, %s9
  %14 = dma.hbm_to_smem %s0, 16, [#allocation3], [#allocation2]
  %15 = dma.done [#allocation2], 16
  %16 = sfence
  $region1: #{tpu_custom_call.1} parent=0
    #allocation4 [shape = 'u8[512]{0}', space=smem, size = 0x200, scoped, tag = 'input window, operand 1, single buffered']
    #allocation5 [shape = 's32[2]{0}', space=sflag, size = 0x8, scoped, tag = 'scoped memory for tpu_custom_call.1']
    #allocation6 [shape = 's32[2]{0}', space=sflag, size = 0x8, scoped, tag = 'scoped memory for tpu_custom_call.1']
    #allocation7 [shape = 's32[2]{0}', space=sflag, size = 0x8, scoped, tag = 'scoped memory for tpu_custom_call.1']
    #allocation8 [shape = 'u8[32768]{0}', space=vmem, size = 0x8000, scoped, tag = 'input window, operand 3']
    #allocation9 [shape = 'u8[65536]{0}', space=vmem, size = 0x10000, scoped, tag = 'output window, operand 0']
    %17 = vsyncpa [#allocation7], 0
    %18 = vsyncpa [#allocation5], 0
    %s19 = scalar_lea.sflag [#allocation5], 1
    %20 = vsyncpa %s19, 0
    %21 = vsyncpa [#allocation6], 0
    %s22 = scalar_lea.sflag [#allocation6], 1
    %23 = vsyncpa %s22, 0
    loop: start=0, step=1, limit=6
    $region2: #{tpu_custom_call.1} parent=1 // loop_pre_header
      _
    $region3: #{tpu_custom_call.1} parent=1 // loop_header
      %s25 = sphi 0, %s29
      %p26 = scmp.ge.s32.totalorder %s25, 6
      %s33 = sphi 0, %s33
      %s35 = sphi 0, %s33
      %s36 = sphi 0, %s35
      %s50 = sphi 0, %s36
      %s54 = sphi 0, %s54
      %s56 = sphi 0, %s54
      %s57 = sphi 0, %s56
      %s71 = sphi 0, %s57
      %s77 = sphi 0, %s79
      %s80 = sphi 0, %s77
      %s81 = sphi 0, %s80
      %s97 = sphi 0, %s81
      %s105 = sphi 0, %s107
      %s108 = sphi 0, %s105
      %s109 = sphi 0, %s108
      %s125 = sphi 0, %s109
      %s133 = sphi 0, %s135
      %s136 = sphi 0, %s133
      %s137 = sphi 0, %s136
      %s153 = sphi 0, %s137
      %s161 = sphi 0, %s163
      %s164 = sphi 0, %s161
      %s165 = sphi 0, %s164
      %s181 = sphi 0, %s165
      %s189 = sphi 0, %s191
      %s192 = sphi 0, %s189
      %s193 = sphi 0, %s192
      %s209 = sphi 0, %s193
      %s215 = sphi 0, %s217
      %s218 = sphi 0, %s215
      %s219 = sphi 0, %s218
      %s235 = sphi 0, %s219
    $region4: #{tpu_custom_call.1} parent=1 // loop_header_branch
      %28 = sbr.rel (%p26) target = $region8
    $region5: #{tpu_custom_call.1} parent=1 // loop_body
      %s30 = ssub.s32 %s25, 1
      %s31 = ssub.s32 %s25, 2
      %s32 = sadd.s32 %s25, 1
      %s34 = sadd.s32 %s33, 1
      %p37 = scmp.eq.s32.totalorder %s25, 3
      %p38 = scmp.ne.s32.totalorder %s33, %s35
      %p39 = scmp.eq.s32.totalorder %s25, 0
      %p40 = por %p38, %p39
      %p41 = scmp.ne.s32.totalorder %s33, %s35
      %p42 = scmp.eq.s32.totalorder %s30, 3
      %p43 = por %p41, %p42
      %p44 = scmp.ne.s32.totalorder %s35, %s36
      %p45 = scmp.eq.s32.totalorder %s30, 0
      %p46 = por %p44, %p45
      %p47 = scmp.ne.s32.totalorder %s35, %s36
      %p48 = scmp.eq.s32.totalorder %s31, 3
      %p49 = por %p47, %p48
      %p51 = scmp.ne.s32.totalorder %s36, %s50
      %p52 = scmp.eq.s32.totalorder %s31, 0
      %p53 = por %p51, %p52
      %s55 = sadd.s32 %s54, 1
      %p58 = scmp.eq.s32.totalorder %s25, 3
      %p59 = scmp.ne.s32.totalorder %s54, %s56
      %p60 = scmp.eq.s32.totalorder %s25, 0
      %p61 = por %p59, %p60
      %p62 = scmp.ne.s32.totalorder %s54, %s56
      %p63 = scmp.eq.s32.totalorder %s30, 3
      %p64 = por %p62, %p63
      %p65 = scmp.ne.s32.totalorder %s56, %s57
      %p66 = scmp.eq.s32.totalorder %s30, 0
      %p67 = por %p65, %p66
      %p68 = scmp.ne.s32.totalorder %s56, %s57
      %p69 = scmp.eq.s32.totalorder %s31, 3
      %p70 = por %p68, %p69
      %p72 = scmp.ne.s32.totalorder %s57, %s71
      %p73 = scmp.eq.s32.totalorder %s31, 0
      %p74 = por %p72, %p73
      %s75 = ssub.s32 %s25, %s32
      %p76 = scmp.eq.s32.totalorder %s75, 0
      %s78 = sadd.s32 %s77, 1
      %s79 = scalar_select %p76, %s77, %s78
      %p82 = pneg %p76
      %p83 = scmp.eq.s32.totalorder %s25, 3
      %p84 = por %p82, %p83
      %p85 = scmp.ne.s32.totalorder %s77, %s80
      %p86 = scmp.eq.s32.totalorder %s25, 0
      %p87 = por %p85, %p86
      %p88 = scmp.ne.s32.totalorder %s77, %s80
      %p89 = scmp.eq.s32.totalorder %s30, 3
      %p90 = por %p88, %p89
      %p91 = scmp.ne.s32.totalorder %s80, %s81
      %p92 = scmp.eq.s32.totalorder %s30, 0
      %p93 = por %p91, %p92
      %p94 = scmp.ne.s32.totalorder %s80, %s81
      %p95 = scmp.eq.s32.totalorder %s31, 3
      %p96 = por %p94, %p95
      %p98 = scmp.ne.s32.totalorder %s81, %s97
      %p99 = scmp.eq.s32.totalorder %s31, 0
      %p100 = por %p98, %p99
      %s101 = sld [smem:[#allocation3 + %s25]]
      %s102 = sld [smem:[#allocation3 + %s32]]
      %s103 = ssub.s32 %s101, %s102
      %p104 = scmp.eq.s32.totalorder %s103, 0
      %s106 = sadd.s32 %s105, 1
      %s107 = scalar_select %p104, %s105, %s106
      %p110 = pneg %p104
      %p111 = scmp.eq.s32.totalorder %s25, 3
      %p112 = por %p110, %p111
      %p113 = scmp.ne.s32.totalorder %s105, %s108
      %p114 = scmp.eq.s32.totalorder %s25, 0
      %p115 = por %p113, %p114
      %p116 = scmp.ne.s32.totalorder %s105, %s108
      %p117 = scmp.eq.s32.totalorder %s30, 3
      %p118 = por %p116, %p117
      %p119 = scmp.ne.s32.totalorder %s108, %s109
      %p120 = scmp.eq.s32.totalorder %s30, 0
      %p121 = por %p119, %p120
      %p122 = scmp.ne.s32.totalorder %s108, %s109
      %p123 = scmp.eq.s32.totalorder %s31, 3
      %p124 = por %p122, %p123
      %p126 = scmp.ne.s32.totalorder %s109, %s125
      %p127 = scmp.eq.s32.totalorder %s31, 0
      %p128 = por %p126, %p127
      %s129 = sld [smem:[#allocation3 + %s25]]
      %s130 = sld [smem:[#allocation3 + %s32]]
      %s131 = ssub.s32 %s129, %s130
      %p132 = scmp.eq.s32.totalorder %s131, 0
      %s134 = sadd.s32 %s133, 1
      %s135 = scalar_select %p132, %s133, %s134
      %p138 = pneg %p132
      %p139 = scmp.eq.s32.totalorder %s25, 3
      %p140 = por %p138, %p139
      %p141 = scmp.ne.s32.totalorder %s133, %s136
      %p142 = scmp.eq.s32.totalorder %s25, 0
      %p143 = por %p141, %p142
      %p144 = scmp.ne.s32.totalorder %s133, %s136
      %p145 = scmp.eq.s32.totalorder %s30, 3
      %p146 = por %p144, %p145
      %p147 = scmp.ne.s32.totalorder %s136, %s137
      %p148 = scmp.eq.s32.totalorder %s30, 0
      %p149 = por %p147, %p148
      %p150 = scmp.ne.s32.totalorder %s136, %s137
      %p151 = scmp.eq.s32.totalorder %s31, 3
      %p152 = por %p150, %p151
      %p154 = scmp.ne.s32.totalorder %s137, %s153
      %p155 = scmp.eq.s32.totalorder %s31, 0
      %p156 = por %p154, %p155
      %s157 = sld [smem:[#allocation3 + %s25]]
      %s158 = sld [smem:[#allocation3 + %s32]]
      %s159 = ssub.s32 %s157, %s158
      %p160 = scmp.eq.s32.totalorder %s159, 0
      %s162 = sadd.s32 %s161, 1
      %s163 = scalar_select %p160, %s161, %s162
      %p166 = pneg %p160
      %p167 = scmp.eq.s32.totalorder %s25, 3
      %p168 = por %p166, %p167
      %p169 = scmp.ne.s32.totalorder %s161, %s164
      %p170 = scmp.eq.s32.totalorder %s25, 0
      %p171 = por %p169, %p170
      %p172 = scmp.ne.s32.totalorder %s161, %s164
      %p173 = scmp.eq.s32.totalorder %s30, 3
      %p174 = por %p172, %p173
      %p175 = scmp.ne.s32.totalorder %s164, %s165
      %p176 = scmp.eq.s32.totalorder %s30, 0
      %p177 = por %p175, %p176
      %p178 = scmp.ne.s32.totalorder %s164, %s165
      %p179 = scmp.eq.s32.totalorder %s31, 3
      %p180 = por %p178, %p179
      %p182 = scmp.ne.s32.totalorder %s165, %s181
      %p183 = scmp.eq.s32.totalorder %s31, 0
      %p184 = por %p182, %p183
      %s185 = sld [smem:[#allocation3 + %s25]]
      %s186 = sld [smem:[#allocation3 + %s32]]
      %s187 = ssub.s32 %s185, %s186
      %p188 = scmp.eq.s32.totalorder %s187, 0
      %s190 = sadd.s32 %s189, 1
      %s191 = scalar_select %p188, %s189, %s190
      %p194 = pneg %p188
      %p195 = scmp.eq.s32.totalorder %s25, 3
      %p196 = por %p194, %p195
      %p197 = scmp.ne.s32.totalorder %s189, %s192
      %p198 = scmp.eq.s32.totalorder %s25, 0
      %p199 = por %p197, %p198
      %p200 = scmp.ne.s32.totalorder %s189, %s192
      %p201 = scmp.eq.s32.totalorder %s30, 3
      %p202 = por %p200, %p201
      %p203 = scmp.ne.s32.totalorder %s192, %s193
      %p204 = scmp.eq.s32.totalorder %s30, 0
      %p205 = por %p203, %p204
      %p206 = scmp.ne.s32.totalorder %s192, %s193
      %p207 = scmp.eq.s32.totalorder %s31, 3
      %p208 = por %p206, %p207
      %p210 = scmp.ne.s32.totalorder %s193, %s209
      %p211 = scmp.eq.s32.totalorder %s31, 0
      %p212 = por %p210, %p211
      %s213 = ssub.s32 %s25, %s32
      %p214 = scmp.eq.s32.totalorder %s213, 0
      %s216 = sadd.s32 %s215, 1
      %s217 = scalar_select %p214, %s215, %s216
      %p220 = pneg %p214
      %p221 = scmp.eq.s32.totalorder %s25, 3
      %p222 = por %p220, %p221
      %p223 = scmp.ne.s32.totalorder %s215, %s218
      %p224 = scmp.eq.s32.totalorder %s25, 0
      %p225 = por %p223, %p224
      %p226 = scmp.ne.s32.totalorder %s215, %s218
      %p227 = scmp.eq.s32.totalorder %s30, 3
      %p228 = por %p226, %p227
      %p229 = scmp.ne.s32.totalorder %s218, %s219
      %p230 = scmp.eq.s32.totalorder %s30, 0
      %p231 = por %p229, %p230
      %p232 = scmp.ne.s32.totalorder %s218, %s219
      %p233 = scmp.eq.s32.totalorder %s31, 3
      %p234 = por %p232, %p233
      %p236 = scmp.ne.s32.totalorder %s219, %s235
      %p237 = scmp.eq.s32.totalorder %s31, 0
      %p238 = por %p236, %p237
      %p239 = scmp.le.s32.totalorder 1, %s25
      %p240 = scmp.lt.s32.totalorder %s25, 5
      %p241 = pnand %p239, %p240
      %p242 = pneg %p241
      // Predicated region
      $region9: #{tpu_custom_call.1} parent=5 // pred_check
        _
      $region10: #{tpu_custom_call.1} parent=5 // pred_check_branch
        %244 = sbr.rel (%p241) target = $region12
      $region11: #{tpu_custom_call.1} parent=5 // pred_region
        %s245 = ssub.s32 %s25, 1
        // Predicated region
        $region13: #{tpu_custom_call.1} parent=11 // pred_check
          %p246 = pneg %p46
        $region14: #{tpu_custom_call.1} parent=11 // pred_check_branch
          %248 = sbr.rel (%p246) target = $region16
        $region15: #{tpu_custom_call.1} parent=11 // pred_region
          %s250 = ssub.s32 16, 16
          %251 = vsyncadd [#allocation7], %s250
          %254 = dma.hbm_to_smem %s1, 16, [#allocation4], [#allocation7]
        $region16: #{tpu_custom_call.1} parent=11 // pred_fallthru
          _
        // Predicated region
        $region17: #{tpu_custom_call.1} parent=11 // pred_check
          %p255 = pneg %p67
        $region18: #{tpu_custom_call.1} parent=11 // pred_check_branch
          %257 = sbr.rel (%p255) target = $region20
        $region19: #{tpu_custom_call.1} parent=11 // pred_region
          _
        $region20: #{tpu_custom_call.1} parent=11 // pred_fallthru
          _
      $region12: #{tpu_custom_call.1} parent=5 // pred_fallthru
        _
      %p258 = scmp.lt.s32.totalorder %s25, 4
      // Predicated region
      $region21: #{tpu_custom_call.1} parent=5 // pred_check
        %p259 = pneg %p258
      $region22: #{tpu_custom_call.1} parent=5 // pred_check_branch
        %261 = sbr.rel (%p259) target = $region24
      $region23: #{tpu_custom_call.1} parent=5 // pred_region
        // Predicated region
        $region25: #{tpu_custom_call.1} parent=23 // pred_check
          %p262 = pneg %p87
        $region26: #{tpu_custom_call.1} parent=23 // pred_check_branch
          %264 = sbr.rel (%p262) target = $region28
        $region27: #{tpu_custom_call.1} parent=23 // pred_region
          %s265 = sand.u32 %s77, 1
          %s266 = scalar_lea.sflag [#allocation5], %s265
          %s267 = sand.u32 %s77, 1
          %s268 = smul.addr %s267, 32
          %s269 = scalar_lea.vmem [#allocation8], %s268
          %s271 = ssub.s32 512, 512
          %272 = vsyncadd %s266, %s271
          %s273 = smul.addr %s25, 8
          %s274 = smul.addr %s273, 64
          %s275 = scalar_lea.hbm %s3, %s274
          %s277 = sshll.u32 %s269, 4
          %s278 = int_to_ptr.vmem [resolvable:$true] %s277
          %280 = dma.hbm_to_vmem [thread:$0]  %s275, 512, %s278, %s266
        $region28: #{tpu_custom_call.1} parent=23 // pred_fallthru
          _
        // Predicated region
        $region29: #{tpu_custom_call.1} parent=23 // pred_check
          %p281 = pneg %p115
        $region30: #{tpu_custom_call.1} parent=23 // pred_check_branch
          %283 = sbr.rel (%p281) target = $region32
        $region31: #{tpu_custom_call.1} parent=23 // pred_region
          %s284 = sld [smem:[#allocation3 + %s25]]
          %p285 = scmp.lt.s32.totalorder %s284, 1
          %s286 = scalar_select %p285, %s284, 1
          %s287 = smul.addr %s286, 4
          %s288 = scalar_lea.vmem %s4, %s287
          %s289 = sld [smem:[#allocation3 + %s25]]
        $region32: #{tpu_custom_call.1} parent=23 // pred_fallthru
          _
        // Predicated region
        $region33: #{tpu_custom_call.1} parent=23 // pred_check
          %p290 = pneg %p143
        $region34: #{tpu_custom_call.1} parent=23 // pred_check_branch
          %292 = sbr.rel (%p290) target = $region36
        $region35: #{tpu_custom_call.1} parent=23 // pred_region
          %s293 = sld [smem:[#allocation3 + %s25]]
          %p294 = scmp.lt.s32.totalorder %s293, 1
          %s295 = scalar_select %p294, %s293, 1
          %s296 = smul.addr %s295, 8
          %s297 = scalar_lea.vmem %s5, %s296
          %s298 = sld [smem:[#allocation3 + %s25]]
        $region36: #{tpu_custom_call.1} parent=23 // pred_fallthru
          _
        // Predicated region
        $region37: #{tpu_custom_call.1} parent=23 // pred_check
          %p299 = pneg %p171
        $region38: #{tpu_custom_call.1} parent=23 // pred_check_branch
          %301 = sbr.rel (%p299) target = $region40
        $region39: #{tpu_custom_call.1} parent=23 // pred_region
          %s302 = sld [smem:[#allocation3 + %s25]]
          %p303 = scmp.lt.s32.totalorder %s302, 1
          %s304 = scalar_select %p303, %s302, 1
          %s305 = smul.addr %s304, 4
          %s306 = scalar_lea.vmem %s6, %s305
          %s307 = sld [smem:[#allocation3 + %s25]]
        $region40: #{tpu_custom_call.1} parent=23 // pred_fallthru
          _
        // Predicated region
        $region41: #{tpu_custom_call.1} parent=23 // pred_check
          %p308 = pneg %p199
        $region42: #{tpu_custom_call.1} parent=23 // pred_check_branch
          %310 = sbr.rel (%p308) target = $region44
        $region43: #{tpu_custom_call.1} parent=23 // pred_region
          %s311 = sld [smem:[#allocation3 + %s25]]
          %p312 = scmp.lt.s32.totalorder %s311, 1
          %s313 = scalar_select %p312, %s311, 1
          %s314 = smul.addr %s313, 8
          %s315 = scalar_lea.vmem %s7, %s314
          %s316 = sld [smem:[#allocation3 + %s25]]
        $region44: #{tpu_custom_call.1} parent=23 // pred_fallthru
          _
      $region24: #{tpu_custom_call.1} parent=5 // pred_fallthru
        _
      %p317 = scmp.le.s32.totalorder 1, %s25
      %p318 = scmp.lt.s32.totalorder %s25, 5
      %p319 = pnand %p317, %p318
      %p320 = pneg %p319
      // Predicated region
      $region45: #{tpu_custom_call.1} parent=5 // pred_check
        _
      $region46: #{tpu_custom_call.1} parent=5 // pred_check_branch
        %322 = sbr.rel (%p319) target = $region48
      $region47: #{tpu_custom_call.1} parent=5 // pred_region
        %s323 = ssub.s32 %s25, 1
        // Predicated region
        $region49: #{tpu_custom_call.1} parent=47 // pred_check
          %p324 = pneg %p46
        $region50: #{tpu_custom_call.1} parent=47 // pred_check_branch
          %326 = sbr.rel (%p324) target = $region52
        $region51: #{tpu_custom_call.1} parent=47 // pred_region
          %327 = dma.done [#allocation7], 16
        $region52: #{tpu_custom_call.1} parent=47 // pred_fallthru
          _
        %s328 = sand.u32 %s80, 1
        %s329 = scalar_lea.sflag [#allocation5], %s328
        %s330 = sand.u32 %s80, 1
        %s331 = smul.addr %s330, 32
        %s332 = scalar_lea.vmem [#allocation8], %s331
        // Predicated region
        $region53: #{tpu_custom_call.1} parent=47 // pred_check
          %p333 = pneg %p93
        $region54: #{tpu_custom_call.1} parent=47 // pred_check_branch
          %335 = sbr.rel (%p333) target = $region56
        $region55: #{tpu_custom_call.1} parent=47 // pred_region
          %336 = dma.done %s329, 512
        $region56: #{tpu_custom_call.1} parent=47 // pred_fallthru
          _
        %337 = sfence
        %p338 = pneg %p46
        %p339 = pneg %p43
        %p340 = pneg %p67
        %p341 = pneg %p64
        %s342 = sand.u32 %s80, 1
        %s343 = scalar_lea.sflag [#allocation5], %s342
        %s344 = sand.u32 %s80, 1
        %s345 = smul.addr %s344, 32
        %s346 = scalar_lea.vmem [#allocation8], %s345
        %p347 = pneg %p93
        %p348 = pneg %p90
        %s349 = sld [smem:[#allocation3 + %s30]]
        %p350 = scmp.lt.s32.totalorder %s349, 1
        %s351 = scalar_select %p350, %s349, 1
        %s352 = smul.addr %s351, 4
        %s353 = scalar_lea.vmem %s4, %s352
        %p354 = pneg %p121
        %p355 = pneg %p118
        %s356 = sld [smem:[#allocation3 + %s30]]
        %p357 = scmp.lt.s32.totalorder %s356, 1
        %s358 = scalar_select %p357, %s356, 1
        %s359 = smul.addr %s358, 8
        %s360 = scalar_lea.vmem %s5, %s359
        %p361 = pneg %p149
        %p362 = pneg %p146
        %s363 = sld [smem:[#allocation3 + %s30]]
        %p364 = scmp.lt.s32.totalorder %s363, 1
        %s365 = scalar_select %p364, %s363, 1
        %s366 = smul.addr %s365, 4
        %s367 = scalar_lea.vmem %s6, %s366
        %p368 = pneg %p177
        %p369 = pneg %p174
        %s370 = sld [smem:[#allocation3 + %s30]]
        %p371 = scmp.lt.s32.totalorder %s370, 1
        %s372 = scalar_select %p371, %s370, 1
        %s373 = smul.addr %s372, 8
        %s374 = scalar_lea.vmem %s7, %s373
        %p375 = pneg %p205
        %p376 = pneg %p202
        %p377 = pneg %p231
        %p378 = pneg %p228
        %s379 = sand.u32 %s218, 1
        %s380 = scalar_lea.sflag [#allocation6], %s379
        %s381 = sand.u32 %s218, 1
        %s382 = smul.addr %s381, 64
        %s383 = scalar_lea.vmem [#allocation9], %s382
        %s384 = sld [smem:[#allocation3 + %s30]]
        %p385 = scmp.lt.s32.totalorder %s384, 1
        %s386 = scalar_select %p385, %s384, 1
        %s387 = smul.addr %s386, 4
        %s388 = scalar_lea.vmem %s4, %s387
        %s389 = sld [smem:[#allocation3 + %s30]]
        %s390 = sld [smem:[#allocation3 + %s30]]
        %p391 = scmp.lt.s32.totalorder %s390, 1
        %s392 = scalar_select %p391, %s390, 1
        %s393 = smul.addr %s392, 8
        %s394 = scalar_lea.vmem %s5, %s393
        %s395 = sld [smem:[#allocation3 + %s30]]
        %s396 = sld [smem:[#allocation3 + %s30]]
        %p397 = scmp.lt.s32.totalorder %s396, 1
        %s398 = scalar_select %p397, %s396, 1
        %s399 = smul.addr %s398, 4
        %s400 = scalar_lea.vmem %s6, %s399
        %s401 = sld [smem:[#allocation3 + %s30]]
        %s402 = sld [smem:[#allocation3 + %s30]]
        %p403 = scmp.lt.s32.totalorder %s402, 1
        %s404 = scalar_select %p403, %s402, 1
        %s405 = smul.addr %s404, 8
        %s406 = scalar_lea.vmem %s7, %s405
        %s407 = sld [smem:[#allocation3 + %s30]]
        %s409 = sld [smem:[#allocation4 + %s30]]
        %v410 = vld [vmem:[%s388] sm:$0xf]
        %v411 = vld [vmem:[%s394] sm:$0xff]
        %v412 = vld [vmem:[%s400] sm:$0xf]
        %v413 = vld [vmem:[%s406] sm:$0xff]
        %v414 = vld [vmem:[%s332] sm:$0xff]
        %v415 = vld [vmem:[%s332 + $0x8] sm:$0xff]
        %v416 = vunpack.c.l.bf16 %v414
        %v417 = vunpack.c.h.bf16 %v414
        %v418 = vunpack.c.l.bf16 %v415
        %v419 = vunpack.c.h.bf16 %v415
        %420 = vrot.lane.b32.xlu0 %v416, 17
        %v421 = vpop.permute.xlu0 %420
        %422 = vrot.lane.b32.xlu0 %v417, 17
        %v423 = vpop.permute.xlu0 %422
        %424 = vrot.lane.b32.xlu0 %v418, 17
        %v425 = vpop.permute.xlu0 %424
        %426 = vrot.lane.b32.xlu0 %v419, 17
        %v427 = vpop.permute.xlu0 %426
        %v428 = vlaneseq
        %v429 = vand.u32 %v428, 127
        %vm430 = vcmp.lt.s32.totalorder %v429, 17
        %v431 = vsel %vm430, %v425, %v427
        %v432 = vsel %vm430, %v423, %v425
        %v433 = vsel %vm430, %v421, %v423
        %v434 = vsel %vm430, %v427, %v421
        %v435 = vld [vmem:[%s2] sm:$0xf]
        %v437 = vlaneseq
        %v438 = vshrl.u32 %v437, 7
        %v439 = vsub.s32 0, %v438
        %v440 = vrot.slane %v435, %v439
        %v441 = vlaneseq
        %v442 = vshrl.u32 %v441, 7
        %v443 = vsub.s32 1, %v442
        %v444 = vrot.slane %v435, %v443
        %v445 = vlaneseq
        %v446 = vshrl.u32 %v445, 7
        %v447 = vsub.s32 2, %v446
        %v448 = vrot.slane %v435, %v447
        %v449 = vlaneseq
        %v450 = vshrl.u32 %v449, 7
        %v451 = vsub.s32 3, %v450
        %v452 = vrot.slane %v435, %v451
        %v457 = vmul.f32 %v434, %v440
        %v458 = vmul.f32 %v433, %v444
        %v459 = vmul.f32 %v432, %v448
        %v460 = vmul.f32 %v431, %v452
        %461 = vrot.lane.b32.xlu0 %v416, 16
        %v462 = vpop.permute.xlu0 %461
        %463 = vrot.lane.b32.xlu0 %v417, 16
        %v464 = vpop.permute.xlu0 %463
        %465 = vrot.lane.b32.xlu0 %v418, 16
        %v466 = vpop.permute.xlu0 %465
        %467 = vrot.lane.b32.xlu0 %v419, 16
        %v468 = vpop.permute.xlu0 %467
        %vm469 = vcmp.lt.s32.totalorder %v429, 16
        %v470 = vsel %vm469, %v466, %v468
        %v471 = vsel %vm469, %v464, %v466
        %v472 = vsel %vm469, %v462, %v464
        %v473 = vsel %vm469, %v468, %v462
        %s474 = scalar_lea.vmem %s2, 4
        %v475 = vld [vmem:[%s474] sm:$0xf]
        %v477 = vlaneseq
        %v478 = vshrl.u32 %v477, 7
        %v479 = vsub.s32 0, %v478
        %v480 = vrot.slane %v475, %v479
        %v481 = vlaneseq
        %v482 = vshrl.u32 %v481, 7
        %v483 = vsub.s32 1, %v482
        %v484 = vrot.slane %v475, %v483
        %v485 = vlaneseq
        %v486 = vshrl.u32 %v485, 7
        %v487 = vsub.s32 2, %v486
        %v488 = vrot.slane %v475, %v487
        %v489 = vlaneseq
        %v490 = vshrl.u32 %v489, 7
        %v491 = vsub.s32 3, %v490
        %v492 = vrot.slane %v475, %v491
        %v497 = vmul.f32 %v473, %v480
        %v498 = vmul.f32 %v472, %v484
        %v499 = vmul.f32 %v471, %v488
        %v500 = vmul.f32 %v470, %v492
        %501 = vrot.lane.b32.xlu0 %v416, 15
        %v502 = vpop.permute.xlu0 %501
        %503 = vrot.lane.b32.xlu0 %v417, 15
        %v504 = vpop.permute.xlu0 %503
        %505 = vrot.lane.b32.xlu0 %v418, 15
        %v506 = vpop.permute.xlu0 %505
        %507 = vrot.lane.b32.xlu0 %v419, 15
        %v508 = vpop.permute.xlu0 %507
        %vm509 = vcmp.lt.s32.totalorder %v429, 15
        %v510 = vsel %vm509, %v506, %v508
        %v511 = vsel %vm509, %v504, %v506
        %v512 = vsel %vm509, %v502, %v504
        %v513 = vsel %vm509, %v508, %v502
        %s514 = scalar_lea.vmem %s2, 8
        %v515 = vld [vmem:[%s514] sm:$0xf]
        %v517 = vlaneseq
        %v518 = vshrl.u32 %v517, 7
        %v519 = vsub.s32 0, %v518
        %v520 = vrot.slane %v515, %v519
        %v521 = vlaneseq
        %v522 = vshrl.u32 %v521, 7
        %v523 = vsub.s32 1, %v522
        %v524 = vrot.slane %v515, %v523
        %v525 = vlaneseq
        %v526 = vshrl.u32 %v525, 7
        %v527 = vsub.s32 2, %v526
        %v528 = vrot.slane %v515, %v527
        %v529 = vlaneseq
        %v530 = vshrl.u32 %v529, 7
        %v531 = vsub.s32 3, %v530
        %v532 = vrot.slane %v515, %v531
        %v537 = vmul.f32 %v513, %v520
        %v538 = vmul.f32 %v512, %v524
        %v539 = vmul.f32 %v511, %v528
        %v540 = vmul.f32 %v510, %v532
        %541 = vrot.lane.b32.xlu0 %v416, 1
        %v542 = vpop.permute.xlu0 %541
        %543 = vrot.lane.b32.xlu0 %v417, 1
        %v544 = vpop.permute.xlu0 %543
        %545 = vrot.lane.b32.xlu0 %v418, 1
        %v546 = vpop.permute.xlu0 %545
        %547 = vrot.lane.b32.xlu0 %v419, 1
        %v548 = vpop.permute.xlu0 %547
        %vm549 = vcmp.lt.s32.totalorder %v429, 1
        %v550 = vsel %vm549, %v546, %v548
        %v551 = vsel %vm549, %v544, %v546
        %v552 = vsel %vm549, %v542, %v544
        %v553 = vsel %vm549, %v548, %v542
        %s554 = scalar_lea.vmem %s2, 12
        %v555 = vld [vmem:[%s554] sm:$0xf]
        %v557 = vlaneseq
        %v558 = vshrl.u32 %v557, 7
        %v559 = vsub.s32 0, %v558
        %v560 = vrot.slane %v555, %v559
        %v561 = vlaneseq
        %v562 = vshrl.u32 %v561, 7
        %v563 = vsub.s32 1, %v562
        %v564 = vrot.slane %v555, %v563
        %v565 = vlaneseq
        %v566 = vshrl.u32 %v565, 7
        %v567 = vsub.s32 2, %v566
        %v568 = vrot.slane %v555, %v567
        %v569 = vlaneseq
        %v570 = vshrl.u32 %v569, 7
        %v571 = vsub.s32 3, %v570
        %v572 = vrot.slane %v555, %v571
        %v577 = vmul.f32 %v553, %v560
        %v578 = vmul.f32 %v552, %v564
        %v579 = vmul.f32 %v551, %v568
        %v580 = vmul.f32 %v550, %v572
        %581 = vrot.lane.b32.xlu0 %v416, 127
        %v582 = vpop.permute.xlu0 %581
        %583 = vrot.lane.b32.xlu0 %v417, 127
        %v584 = vpop.permute.xlu0 %583
        %585 = vrot.lane.b32.xlu0 %v418, 127
        %v586 = vpop.permute.xlu0 %585
        %587 = vrot.lane.b32.xlu0 %v419, 127
        %v588 = vpop.permute.xlu0 %587
        %vm589 = vcmp.lt.s32.totalorder %v429, 127
        %v590 = vsel %vm589, %v586, %v588
        %v591 = vsel %vm589, %v584, %v586
        %v592 = vsel %vm589, %v582, %v584
        %v593 = vsel %vm589, %v588, %v582
        %s594 = scalar_lea.vmem %s2, 20
        %v595 = vld [vmem:[%s594] sm:$0xf]
        %v597 = vlaneseq
        %v598 = vshrl.u32 %v597, 7
        %v599 = vsub.s32 0, %v598
        %v600 = vrot.slane %v595, %v599
        %v601 = vlaneseq
        %v602 = vshrl.u32 %v601, 7
        %v603 = vsub.s32 1, %v602
        %v604 = vrot.slane %v595, %v603
        %v605 = vlaneseq
        %v606 = vshrl.u32 %v605, 7
        %v607 = vsub.s32 2, %v606
        %v608 = vrot.slane %v595, %v607
        %v609 = vlaneseq
        %v610 = vshrl.u32 %v609, 7
        %v611 = vsub.s32 3, %v610
        %v612 = vrot.slane %v595, %v611
        %v617 = vmul.f32 %v592, %v600
        %v618 = vmul.f32 %v591, %v604
        %v619 = vmul.f32 %v590, %v608
        %v620 = vmul.f32 %v593, %v612
        %621 = vrot.lane.b32.xlu0 %v416, 113
        %v622 = vpop.permute.xlu0 %621
        %623 = vrot.lane.b32.xlu0 %v417, 113
        %v624 = vpop.permute.xlu0 %623
        %625 = vrot.lane.b32.xlu0 %v418, 113
        %v626 = vpop.permute.xlu0 %625
        %627 = vrot.lane.b32.xlu0 %v419, 113
        %v628 = vpop.permute.xlu0 %627
        %vm629 = vcmp.lt.s32.totalorder %v429, 113
        %v630 = vsel %vm629, %v626, %v628
        %v631 = vsel %vm629, %v624, %v626
        %v632 = vsel %vm629, %v622, %v624
        %v633 = vsel %vm629, %v628, %v622
        %s634 = scalar_lea.vmem %s2, 24
        %v635 = vld [vmem:[%s634] sm:$0xf]
        %v637 = vlaneseq
        %v638 = vshrl.u32 %v637, 7
        %v639 = vsub.s32 0, %v638
        %v640 = vrot.slane %v635, %v639
        %v641 = vlaneseq
        %v642 = vshrl.u32 %v641, 7
        %v643 = vsub.s32 1, %v642
        %v644 = vrot.slane %v635, %v643
        %v645 = vlaneseq
        %v646 = vshrl.u32 %v645, 7
        %v647 = vsub.s32 2, %v646
        %v648 = vrot.slane %v635, %v647
        %v649 = vlaneseq
        %v650 = vshrl.u32 %v649, 7
        %v651 = vsub.s32 3, %v650
        %v652 = vrot.slane %v635, %v651
        %v657 = vmul.f32 %v632, %v640
        %v658 = vmul.f32 %v631, %v644
        %v659 = vmul.f32 %v630, %v648
        %v660 = vmul.f32 %v633, %v652
        %661 = vrot.lane.b32.xlu0 %v416, 112
        %v662 = vpop.permute.xlu0 %661
        %663 = vrot.lane.b32.xlu0 %v417, 112
        %v664 = vpop.permute.xlu0 %663
        %665 = vrot.lane.b32.xlu0 %v418, 112
        %v666 = vpop.permute.xlu0 %665
        %667 = vrot.lane.b32.xlu0 %v419, 112
        %v668 = vpop.permute.xlu0 %667
        %vm669 = vcmp.lt.s32.totalorder %v429, 112
        %v670 = vsel %vm669, %v666, %v668
        %v671 = vsel %vm669, %v664, %v666
        %v672 = vsel %vm669, %v662, %v664
        %v673 = vsel %vm669, %v668, %v662
        %s674 = scalar_lea.vmem %s2, 28
        %v675 = vld [vmem:[%s674] sm:$0xf]
        %v677 = vlaneseq
        %v678 = vshrl.u32 %v677, 7
        %v679 = vsub.s32 0, %v678
        %v680 = vrot.slane %v675, %v679
        %v681 = vlaneseq
        %v682 = vshrl.u32 %v681, 7
        %v683 = vsub.s32 1, %v682
        %v684 = vrot.slane %v675, %v683
        %v685 = vlaneseq
        %v686 = vshrl.u32 %v685, 7
        %v687 = vsub.s32 2, %v686
        %v688 = vrot.slane %v675, %v687
        %v689 = vlaneseq
        %v690 = vshrl.u32 %v689, 7
        %v691 = vsub.s32 3, %v690
        %v692 = vrot.slane %v675, %v691
        %v697 = vmul.f32 %v672, %v680
        %v698 = vmul.f32 %v671, %v684
        %v699 = vmul.f32 %v670, %v688
        %v700 = vmul.f32 %v673, %v692
        %701 = vrot.lane.b32.xlu0 %v416, 111
        %v702 = vpop.permute.xlu0 %701
        %703 = vrot.lane.b32.xlu0 %v417, 111
        %v704 = vpop.permute.xlu0 %703
        %705 = vrot.lane.b32.xlu0 %v418, 111
        %v706 = vpop.permute.xlu0 %705
        %707 = vrot.lane.b32.xlu0 %v419, 111
        %v708 = vpop.permute.xlu0 %707
        %vm709 = vcmp.lt.s32.totalorder %v429, 111
        %v710 = vsel %vm709, %v706, %v708
        %v711 = vsel %vm709, %v704, %v706
        %v712 = vsel %vm709, %v702, %v704
        %v713 = vsel %vm709, %v708, %v702
        %s714 = scalar_lea.vmem %s2, 32
        %v715 = vld [vmem:[%s714] sm:$0xf]
        %v717 = vlaneseq
        %v718 = vshrl.u32 %v717, 7
        %v719 = vsub.s32 0, %v718
        %v720 = vrot.slane %v715, %v719
        %v721 = vlaneseq
        %v722 = vshrl.u32 %v721, 7
        %v723 = vsub.s32 1, %v722
        %v724 = vrot.slane %v715, %v723
        %v725 = vlaneseq
        %v726 = vshrl.u32 %v725, 7
        %v727 = vsub.s32 2, %v726
        %v728 = vrot.slane %v715, %v727
        %v729 = vlaneseq
        %v730 = vshrl.u32 %v729, 7
        %v731 = vsub.s32 3, %v730
        %v732 = vrot.slane %v715, %v731
        %v737 = vmul.f32 %v712, %v720
        %v738 = vmul.f32 %v711, %v724
        %v739 = vmul.f32 %v710, %v728
        %v740 = vmul.f32 %v713, %v732
        %v741 = vpack.c.bf16 %v497, %v457
        %v742 = vpack.c.bf16 %v498, %v458
        %v743 = vpack.c.bf16 %v499, %v459
        %v744 = vpack.c.bf16 %v500, %v460
        %v745 = vpack.c.bf16 %v577, %v537
        %v746 = vpack.c.bf16 %v578, %v538
        %v747 = vpack.c.bf16 %v579, %v539
        %v748 = vpack.c.bf16 %v580, %v540
        %v749 = vpack.c.bf16 %v617, %v416
        %v750 = vpack.c.bf16 %v618, %v417
        %v751 = vpack.c.bf16 %v619, %v418
        %v752 = vpack.c.bf16 %v620, %v419
        %v753 = vpack.c.bf16 %v697, %v657
        %v754 = vpack.c.bf16 %v698, %v658
        %v755 = vpack.c.bf16 %v699, %v659
        %v756 = vpack.c.bf16 %v700, %v660
        %v757 = vpack.c.bf16 %v737, %v737
        %v758 = vpack.c.bf16 %v738, %v738
        %v759 = vpack.c.bf16 %v739, %v739
        %v760 = vpack.c.bf16 %v740, %v740
        %762 = vset.pattern.permute.xlu0 0
        %763 = vperm.xlu0 %762, %v411
        %v764 = vpop.permute.xlu0 %763
        %vm766 = vcmask 588800
        %v768 = vsel %vm766, %v410, 0
        %vm770 = vcmask 1043456
        %v772 = vsel %vm770, %v757, 0
        %v775 = vsel %vm770, %v758, 0
        %v778 = vsel %vm770, %v759, 0
        %v781 = vsel %vm770, %v760, 0
        %783 = vmatprep.subr.bf16.mxu0 %v742
        %784 = vmatpush1.bf16.msra.mxu0 %v741
        %785 = vmatprep.subr.bf16.mxu0 %v746
        %786 = vmatpush1.bf16.msra.mxu0 %v745
        %787 = vmatprep.subr.bf16.mxu0 %v750
        %788 = vmatpush1.bf16.msra.mxu0 %v749
        %789 = vmatprep.subr.bf16.mxu0 %v754
        %790 = vmatpush1.bf16.msra.mxu0 %v753
        %791 = vmatprep.subr.bf16.mxu0 %v775
        %792 = vmatpush1.bf16.msra.mxu0 %v772
        %793 = vmatprep.subr.bf16.mxu0 0
        %794 = vmatpush1.bf16.msra.mxu0 0
        %795 = vmatprep.subr.bf16.mxu0 0
        %796 = vmatpush1.bf16.msra.mxu0 0
        %797 = vmatprep.subr.bf16.mxu0 0
        %798 = vmatpush1.bf16.msra.mxu0 0
        %799 = vmatprep.subr.bf16.mxu0 0
        %800 = vmatpush1.bf16.msra.mxu0 0
        %801 = vmatprep.subr.bf16.mxu0 0
        %802 = vmatpush1.bf16.msra.mxu0 0
        %803 = vmatprep.subr.bf16.mxu0 0
        %804 = vmatpush1.bf16.msra.mxu0 0
        %805 = vmatprep.subr.bf16.mxu0 0
        %806 = vmatpush1.bf16.msra.mxu0 0
        %807 = vmatprep.subr.bf16.mxu0 0
        %808 = vmatpush1.bf16.msra.mxu0 0
        %809 = vmatprep.subr.bf16.mxu0 0
        %810 = vmatpush1.bf16.msra.mxu0 0
        %811 = vmatprep.subr.bf16.mxu0 0
        %812 = vmatpush1.bf16.msra.mxu0 0
        %813 = vmatprep.subr.bf16.mxu0 0
        %814 = vmatpush1.bf16.msra.mxu0 0
        %815 = vmatprep.mubr.bf16.mxu0 0
        %816 = vmatmul.mubr.bf16.gmra.mrb[0].mxu0 %v768
        %v817 = vpop.f32.mrb[0].mxu0
        %v818 = vadd.f32 %v764, %v817
        %v819 = vpop.f32.mrb[0].mxu0
        %v820 = vadd.f32 %v764, %v819
        %v821 = vpop.f32.mrb[0].mxu0
        %v822 = vpop.f32.mrb[0].mxu0
        %823 = vdwg.mxu0
        %824 = vmatprep.subr.bf16.mxu0 %v744
        %825 = vmatpush1.bf16.msra.mxu0 %v743
        %826 = vmatprep.subr.bf16.mxu0 %v748
        %827 = vmatpush1.bf16.msra.mxu0 %v747
        %828 = vmatprep.subr.bf16.mxu0 %v752
        %829 = vmatpush1.bf16.msra.mxu0 %v751
        %830 = vmatprep.subr.bf16.mxu0 %v756
        %831 = vmatpush1.bf16.msra.mxu0 %v755
        %832 = vmatprep.subr.bf16.mxu0 %v781
        %833 = vmatpush1.bf16.msra.mxu0 %v778
        %834 = vmatprep.subr.bf16.mxu0 0
        %835 = vmatpush1.bf16.msra.mxu0 0
        %836 = vmatprep.subr.bf16.mxu0 0
        %837 = vmatpush1.bf16.msra.mxu0 0
        %838 = vmatprep.subr.bf16.mxu0 0
        %839 = vmatpush1.bf16.msra.mxu0 0
        %840 = vmatprep.subr.bf16.mxu0 0
        %841 = vmatpush1.bf16.msra.mxu0 0
        %842 = vmatprep.subr.bf16.mxu0 0
        %843 = vmatpush1.bf16.msra.mxu0 0
        %844 = vmatprep.subr.bf16.mxu0 0
        %845 = vmatpush1.bf16.msra.mxu0 0
        %846 = vmatprep.subr.bf16.mxu0 0
        %847 = vmatpush1.bf16.msra.mxu0 0
        %848 = vmatprep.subr.bf16.mxu0 0
        %849 = vmatpush1.bf16.msra.mxu0 0
        %850 = vmatprep.subr.bf16.mxu0 0
        %851 = vmatpush1.bf16.msra.mxu0 0
        %852 = vmatprep.subr.bf16.mxu0 0
        %853 = vmatpush1.bf16.msra.mxu0 0
        %854 = vmatprep.subr.bf16.mxu0 0
        %855 = vmatpush1.bf16.msra.mxu0 0
        %856 = vmatprep.mubr.bf16.mxu0 0
        %857 = vmatmul.mubr.bf16.gmra.mrb[0].mxu0 %v768
        %v858 = vpop.f32.mrb[0].mxu0
        %v859 = vadd.f32 %v764, %v858
        %v860 = vpop.f32.mrb[0].mxu0
        %v861 = vadd.f32 %v764, %v860
        %v862 = vpop.f32.mrb[0].mxu0
        %v863 = vpop.f32.mrb[0].mxu0
        %864 = vdwg.mxu0
        %v865 = vmax.f32 %v818, 0.0
        %v866 = vmax.f32 %v820, 0.0
        %v867 = vmax.f32 %v859, 0.0
        %v868 = vmax.f32 %v861, 0.0
        %869 = vrot.lane.b32.xlu0 %v865, 17
        %v870 = vpop.permute.xlu0 %869
        %871 = vrot.lane.b32.xlu0 %v866, 17
        %v872 = vpop.permute.xlu0 %871
        %873 = vrot.lane.b32.xlu0 %v867, 17
        %v874 = vpop.permute.xlu0 %873
        %875 = vrot.lane.b32.xlu0 %v868, 17
        %v876 = vpop.permute.xlu0 %875
        %v877 = vsel %vm430, %v874, %v876
        %v878 = vsel %vm430, %v872, %v874
        %v879 = vsel %vm430, %v870, %v872
        %v880 = vsel %vm430, %v876, %v870
        %v881 = vmul.f32 %v880, %v440
        %v882 = vmul.f32 %v879, %v444
        %v883 = vmul.f32 %v878, %v448
        %v884 = vmul.f32 %v877, %v452
        %885 = vrot.lane.b32.xlu0 %v865, 16
        %v886 = vpop.permute.xlu0 %885
        %887 = vrot.lane.b32.xlu0 %v866, 16
        %v888 = vpop.permute.xlu0 %887
        %889 = vrot.lane.b32.xlu0 %v867, 16
        %v890 = vpop.permute.xlu0 %889
        %891 = vrot.lane.b32.xlu0 %v868, 16
        %v892 = vpop.permute.xlu0 %891
        %v893 = vsel %vm469, %v890, %v892
        %v894 = vsel %vm469, %v888, %v890
        %v895 = vsel %vm469, %v886, %v888
        %v896 = vsel %vm469, %v892, %v886
        %v897 = vmul.f32 %v896, %v480
        %v898 = vmul.f32 %v895, %v484
        %v899 = vmul.f32 %v894, %v488
        %v900 = vmul.f32 %v893, %v492
        %901 = vrot.lane.b32.xlu0 %v865, 15
        %v902 = vpop.permute.xlu0 %901
        %903 = vrot.lane.b32.xlu0 %v866, 15
        %v904 = vpop.permute.xlu0 %903
        %905 = vrot.lane.b32.xlu0 %v867, 15
        %v906 = vpop.permute.xlu0 %905
        %907 = vrot.lane.b32.xlu0 %v868, 15
        %v908 = vpop.permute.xlu0 %907
        %v909 = vsel %vm509, %v906, %v908
        %v910 = vsel %vm509, %v904, %v906
        %v911 = vsel %vm509, %v902, %v904
        %v912 = vsel %vm509, %v908, %v902
        %v913 = vmul.f32 %v912, %v520
        %v914 = vmul.f32 %v911, %v524
        %v915 = vmul.f32 %v910, %v528
        %v916 = vmul.f32 %v909, %v532
        %917 = vrot.lane.b32.xlu0 %v865, 1
        %v918 = vpop.permute.xlu0 %917
        %919 = vrot.lane.b32.xlu0 %v866, 1
        %v920 = vpop.permute.xlu0 %919
        %921 = vrot.lane.b32.xlu0 %v867, 1
        %v922 = vpop.permute.xlu0 %921
        %923 = vrot.lane.b32.xlu0 %v868, 1
        %v924 = vpop.permute.xlu0 %923
        %v925 = vsel %vm549, %v922, %v924
        %v926 = vsel %vm549, %v920, %v922
        %v927 = vsel %vm549, %v918, %v920
        %v928 = vsel %vm549, %v924, %v918
        %v929 = vmul.f32 %v928, %v560
        %v930 = vmul.f32 %v927, %v564
        %v931 = vmul.f32 %v926, %v568
        %v932 = vmul.f32 %v925, %v572
        %933 = vrot.lane.b32.xlu0 %v865, 127
        %v934 = vpop.permute.xlu0 %933
        %935 = vrot.lane.b32.xlu0 %v866, 127
        %v936 = vpop.permute.xlu0 %935
        %937 = vrot.lane.b32.xlu0 %v867, 127
        %v938 = vpop.permute.xlu0 %937
        %939 = vrot.lane.b32.xlu0 %v868, 127
        %v940 = vpop.permute.xlu0 %939
        %v941 = vsel %vm589, %v938, %v940
        %v942 = vsel %vm589, %v936, %v938
        %v943 = vsel %vm589, %v934, %v936
        %v944 = vsel %vm589, %v940, %v934
        %v945 = vmul.f32 %v943, %v600
        %v946 = vmul.f32 %v942, %v604
        %v947 = vmul.f32 %v941, %v608
        %v948 = vmul.f32 %v944, %v612
        %949 = vrot.lane.b32.xlu0 %v865, 113
        %v950 = vpop.permute.xlu0 %949
        %951 = vrot.lane.b32.xlu0 %v866, 113
        %v952 = vpop.permute.xlu0 %951
        %953 = vrot.lane.b32.xlu0 %v867, 113
        %v954 = vpop.permute.xlu0 %953
        %955 = vrot.lane.b32.xlu0 %v868, 113
        %v956 = vpop.permute.xlu0 %955
        %v957 = vsel %vm629, %v954, %v956
        %v958 = vsel %vm629, %v952, %v954
        %v959 = vsel %vm629, %v950, %v952
        %v960 = vsel %vm629, %v956, %v950
        %v961 = vmul.f32 %v959, %v640
        %v962 = vmul.f32 %v958, %v644
        %v963 = vmul.f32 %v957, %v648
        %v964 = vmul.f32 %v960, %v652
        %965 = vrot.lane.b32.xlu0 %v865, 112
        %v966 = vpop.permute.xlu0 %965
        %967 = vrot.lane.b32.xlu0 %v866, 112
        %v968 = vpop.permute.xlu0 %967
        %969 = vrot.lane.b32.xlu0 %v867, 112
        %v970 = vpop.permute.xlu0 %969
        %971 = vrot.lane.b32.xlu0 %v868, 112
        %v972 = vpop.permute.xlu0 %971
        %v973 = vsel %vm669, %v970, %v972
        %v974 = vsel %vm669, %v968, %v970
        %v975 = vsel %vm669, %v966, %v968
        %v976 = vsel %vm669, %v972, %v966
        %v977 = vmul.f32 %v975, %v680
        %v978 = vmul.f32 %v974, %v684
        %v979 = vmul.f32 %v973, %v688
        %v980 = vmul.f32 %v976, %v692
        %981 = vrot.lane.b32.xlu0 %v865, 111
        %v982 = vpop.permute.xlu0 %981
        %983 = vrot.lane.b32.xlu0 %v866, 111
        %v984 = vpop.permute.xlu0 %983
        %985 = vrot.lane.b32.xlu0 %v867, 111
        %v986 = vpop.permute.xlu0 %985
        %987 = vrot.lane.b32.xlu0 %v868, 111
        %v988 = vpop.permute.xlu0 %987
        %v989 = vsel %vm709, %v986, %v988
        %v990 = vsel %vm709, %v984, %v986
        %v991 = vsel %vm709, %v982, %v984
        %v992 = vsel %vm709, %v988, %v982
        %v993 = vmul.f32 %v991, %v720
        %v994 = vmul.f32 %v990, %v724
        %v995 = vmul.f32 %v989, %v728
        %v996 = vmul.f32 %v992, %v732
        %v997 = vpack.c.bf16 %v897, %v881
        %v998 = vpack.c.bf16 %v898, %v882
        %v999 = vpack.c.bf16 %v899, %v883
        %v1000 = vpack.c.bf16 %v900, %v884
        %v1001 = vpack.c.bf16 %v929, %v913
        %v1002 = vpack.c.bf16 %v930, %v914
        %v1003 = vpack.c.bf16 %v931, %v915
        %v1004 = vpack.c.bf16 %v932, %v916
        %v1005 = vpack.c.bf16 %v945, %v865
        %v1006 = vpack.c.bf16 %v946, %v866
        %v1007 = vpack.c.bf16 %v947, %v867
        %v1008 = vpack.c.bf16 %v948, %v868
        %v1009 = vpack.c.bf16 %v977, %v961
        %v1010 = vpack.c.bf16 %v978, %v962
        %v1011 = vpack.c.bf16 %v979, %v963
        %v1012 = vpack.c.bf16 %v980, %v964
        %v1013 = vpack.c.bf16 %v993, %v993
        %v1014 = vpack.c.bf16 %v994, %v994
        %v1015 = vpack.c.bf16 %v995, %v995
        %v1016 = vpack.c.bf16 %v996, %v996
        %1018 = vset.pattern.permute.xlu0 0
        %1019 = vperm.xlu0 %1018, %v413
        %v1020 = vpop.permute.xlu0 %1019
        %v1023 = vsel %vm766, %v412, 0
        %v1026 = vsel %vm770, %v1013, 0
        %v1029 = vsel %vm770, %v1014, 0
        %v1032 = vsel %vm770, %v1015, 0
        %v1035 = vsel %vm770, %v1016, 0
        %1037 = vmatprep.subr.bf16.mxu0 %v998
        %1038 = vmatpush1.bf16.msra.mxu0 %v997
        %1039 = vmatprep.subr.bf16.mxu0 %v1002
        %1040 = vmatpush1.bf16.msra.mxu0 %v1001
        %1041 = vmatprep.subr.bf16.mxu0 %v1006
        %1042 = vmatpush1.bf16.msra.mxu0 %v1005
        %1043 = vmatprep.subr.bf16.mxu0 %v1010
        %1044 = vmatpush1.bf16.msra.mxu0 %v1009
        %1045 = vmatprep.subr.bf16.mxu0 %v1029
        %1046 = vmatpush1.bf16.msra.mxu0 %v1026
        %1047 = vmatprep.subr.bf16.mxu0 0
        %1048 = vmatpush1.bf16.msra.mxu0 0
        %1049 = vmatprep.subr.bf16.mxu0 0
        %1050 = vmatpush1.bf16.msra.mxu0 0
        %1051 = vmatprep.subr.bf16.mxu0 0
        %1052 = vmatpush1.bf16.msra.mxu0 0
        %1053 = vmatprep.subr.bf16.mxu0 0
        %1054 = vmatpush1.bf16.msra.mxu0 0
        %1055 = vmatprep.subr.bf16.mxu0 0
        %1056 = vmatpush1.bf16.msra.mxu0 0
        %1057 = vmatprep.subr.bf16.mxu0 0
        %1058 = vmatpush1.bf16.msra.mxu0 0
        %1059 = vmatprep.subr.bf16.mxu0 0
        %1060 = vmatpush1.bf16.msra.mxu0 0
        %1061 = vmatprep.subr.bf16.mxu0 0
        %1062 = vmatpush1.bf16.msra.mxu0 0
        %1063 = vmatprep.subr.bf16.mxu0 0
        %1064 = vmatpush1.bf16.msra.mxu0 0
        %1065 = vmatprep.subr.bf16.mxu0 0
        %1066 = vmatpush1.bf16.msra.mxu0 0
        %1067 = vmatprep.subr.bf16.mxu0 0
        %1068 = vmatpush1.bf16.msra.mxu0 0
        %1069 = vmatprep.mubr.bf16.mxu0 0
        %1070 = vmatmul.mubr.bf16.gmra.mrb[0].mxu0 %v1023
        %v1071 = vpop.f32.mrb[0].mxu0
        %v1072 = vadd.f32 %v1020, %v1071
        %v1073 = vpop.f32.mrb[0].mxu0
        %v1074 = vadd.f32 %v1020, %v1073
        %v1075 = vpop.f32.mrb[0].mxu0
        %v1076 = vpop.f32.mrb[0].mxu0
        %1077 = vdwg.mxu0
        %1078 = vmatprep.subr.bf16.mxu0 %v1000
        %1079 = vmatpush1.bf16.msra.mxu0 %v999
        %1080 = vmatprep.subr.bf16.mxu0 %v1004
        %1081 = vmatpush1.bf16.msra.mxu0 %v1003
        %1082 = vmatprep.subr.bf16.mxu0 %v1008
        %1083 = vmatpush1.bf16.msra.mxu0 %v1007
        %1084 = vmatprep.subr.bf16.mxu0 %v1012
        %1085 = vmatpush1.bf16.msra.mxu0 %v1011
        %1086 = vmatprep.subr.bf16.mxu0 %v1035
        %1087 = vmatpush1.bf16.msra.mxu0 %v1032
        %1088 = vmatprep.subr.bf16.mxu0 0
        %1089 = vmatpush1.bf16.msra.mxu0 0
        %1090 = vmatprep.subr.bf16.mxu0 0
        %1091 = vmatpush1.bf16.msra.mxu0 0
        %1092 = vmatprep.subr.bf16.mxu0 0
        %1093 = vmatpush1.bf16.msra.mxu0 0
        %1094 = vmatprep.subr.bf16.mxu0 0
        %1095 = vmatpush1.bf16.msra.mxu0 0
        %1096 = vmatprep.subr.bf16.mxu0 0
        %1097 = vmatpush1.bf16.msra.mxu0 0
        %1098 = vmatprep.subr.bf16.mxu0 0
        %1099 = vmatpush1.bf16.msra.mxu0 0
        %1100 = vmatprep.subr.bf16.mxu0 0
        %1101 = vmatpush1.bf16.msra.mxu0 0
        %1102 = vmatprep.subr.bf16.mxu0 0
        %1103 = vmatpush1.bf16.msra.mxu0 0
        %1104 = vmatprep.subr.bf16.mxu0 0
        %1105 = vmatpush1.bf16.msra.mxu0 0
        %1106 = vmatprep.subr.bf16.mxu0 0
        %1107 = vmatpush1.bf16.msra.mxu0 0
        %1108 = vmatprep.subr.bf16.mxu0 0
        %1109 = vmatpush1.bf16.msra.mxu0 0
        %1110 = vmatprep.mubr.bf16.mxu0 0
        %1111 = vmatmul.mubr.bf16.gmra.mrb[0].mxu0 %v1023
        %v1112 = vpop.f32.mrb[0].mxu0
        %v1113 = vadd.f32 %v1020, %v1112
        %v1114 = vpop.f32.mrb[0].mxu0
        %v1115 = vadd.f32 %v1020, %v1114
        %v1116 = vpop.f32.mrb[0].mxu0
        %v1117 = vpop.f32.mrb[0].mxu0
        %1118 = vdwg.mxu0
        %v1119 = vstv %s409
        %v1120 = vmul.f32 %v1072, %v1119
        %v1121 = vmul.f32 %v1074, %v1119
        %v1122 = vmul.f32 %v1113, %v1119
        %v1123 = vmul.f32 %v1115, %v1119
        %v1124 = vadd.f32 %v1120, %v416
        %v1125 = vadd.f32 %v1121, %v417
        %v1126 = vadd.f32 %v1122, %v418
        %v1127 = vadd.f32 %v1123, %v419
        %1128 = vst [vmem:[%s383] sm:$0xff] %v1124
        %1129 = vst [vmem:[%s383 + $0x8] sm:$0xff] %v1125
        %1130 = vst [vmem:[%s383 + $0x10] sm:$0xff] %v1126
        %1131 = vst [vmem:[%s383 + $0x18] sm:$0xff] %v1127
        %v1132 = vld [vmem:[%s332 + $0x10] sm:$0xff]
        %v1133 = vld [vmem:[%s332 + $0x18] sm:$0xff]
        %v1134 = vunpack.c.l.bf16 %v1132
        %v1135 = vunpack.c.h.bf16 %v1132
        %v1136 = vunpack.c.l.bf16 %v1133
        %v1137 = vunpack.c.h.bf16 %v1133
        %1138 = vrot.lane.b32.xlu0 %v1134, 17
        %v1139 = vpop.permute.xlu0 %1138
        %1140 = vrot.lane.b32.xlu0 %v1135, 17
        %v1141 = vpop.permute.xlu0 %1140
        %1142 = vrot.lane.b32.xlu0 %v1136, 17
        %v1143 = vpop.permute.xlu0 %1142
        %1144 = vrot.lane.b32.xlu0 %v1137, 17
        %v1145 = vpop.permute.xlu0 %1144
        %v1146 = vsel %vm430, %v1143, %v1145
        %v1147 = vsel %vm430, %v1141, %v1143
        %v1148 = vsel %vm430, %v1139, %v1141
        %v1149 = vsel %vm430, %v1145, %v1139
        %v1150 = vld [vmem:[%s2] sm:$0xf]
        %v1152 = vlaneseq
        %v1153 = vshrl.u32 %v1152, 7
        %v1154 = vsub.s32 0, %v1153
        %v1155 = vrot.slane %v1150, %v1154
        %v1156 = vlaneseq
        %v1157 = vshrl.u32 %v1156, 7
        %v1158 = vsub.s32 1, %v1157
        %v1159 = vrot.slane %v1150, %v1158
        %v1160 = vlaneseq
        %v1161 = vshrl.u32 %v1160, 7
        %v1162 = vsub.s32 2, %v1161
        %v1163 = vrot.slane %v1150, %v1162
        %v1164 = vlaneseq
        %v1165 = vshrl.u32 %v1164, 7
        %v1166 = vsub.s32 3, %v1165
        %v1167 = vrot.slane %v1150, %v1166
        %v1172 = vmul.f32 %v1149, %v1155
        %v1173 = vmul.f32 %v1148, %v1159
        %v1174 = vmul.f32 %v1147, %v1163
        %v1175 = vmul.f32 %v1146, %v1167
        %1176 = vrot.lane.b32.xlu0 %v1134, 16
        %v1177 = vpop.permute.xlu0 %1176
        %1178 = vrot.lane.b32.xlu0 %v1135, 16
        %v1179 = vpop.permute.xlu0 %1178
        %1180 = vrot.lane.b32.xlu0 %v1136, 16
        %v1181 = vpop.permute.xlu0 %1180
        %1182 = vrot.lane.b32.xlu0 %v1137, 16
        %v1183 = vpop.permute.xlu0 %1182
        %v1184 = vsel %vm469, %v1181, %v1183
        %v1185 = vsel %vm469, %v1179, %v1181
        %v1186 = vsel %vm469, %v1177, %v1179
        %v1187 = vsel %vm469, %v1183, %v1177
        %v1188 = vld [vmem:[%s474] sm:$0xf]
        %v1190 = vlaneseq
        %v1191 = vshrl.u32 %v1190, 7
        %v1192 = vsub.s32 0, %v1191
        %v1193 = vrot.slane %v1188, %v1192
        %v1194 = vlaneseq
        %v1195 = vshrl.u32 %v1194, 7
        %v1196 = vsub.s32 1, %v1195
        %v1197 = vrot.slane %v1188, %v1196
        %v1198 = vlaneseq
        %v1199 = vshrl.u32 %v1198, 7
        %v1200 = vsub.s32 2, %v1199
        %v1201 = vrot.slane %v1188, %v1200
        %v1202 = vlaneseq
        %v1203 = vshrl.u32 %v1202, 7
        %v1204 = vsub.s32 3, %v1203
        %v1205 = vrot.slane %v1188, %v1204
        %v1210 = vmul.f32 %v1187, %v1193
        %v1211 = vmul.f32 %v1186, %v1197
        %v1212 = vmul.f32 %v1185, %v1201
        %v1213 = vmul.f32 %v1184, %v1205
        %1214 = vrot.lane.b32.xlu0 %v1134, 15
        %v1215 = vpop.permute.xlu0 %1214
        %1216 = vrot.lane.b32.xlu0 %v1135, 15
        %v1217 = vpop.permute.xlu0 %1216
        %1218 = vrot.lane.b32.xlu0 %v1136, 15
        %v1219 = vpop.permute.xlu0 %1218
        %1220 = vrot.lane.b32.xlu0 %v1137, 15
        %v1221 = vpop.permute.xlu0 %1220
        %v1222 = vsel %vm509, %v1219, %v1221
        %v1223 = vsel %vm509, %v1217, %v1219
        %v1224 = vsel %vm509, %v1215, %v1217
        %v1225 = vsel %vm509, %v1221, %v1215
        %v1226 = vld [vmem:[%s514] sm:$0xf]
        %v1228 = vlaneseq
        %v1229 = vshrl.u32 %v1228, 7
        %v1230 = vsub.s32 0, %v1229
        %v1231 = vrot.slane %v1226, %v1230
        %v1232 = vlaneseq
        %v1233 = vshrl.u32 %v1232, 7
        %v1234 = vsub.s32 1, %v1233
        %v1235 = vrot.slane %v1226, %v1234
        %v1236 = vlaneseq
        %v1237 = vshrl.u32 %v1236, 7
        %v1238 = vsub.s32 2, %v1237
        %v1239 = vrot.slane %v1226, %v1238
        %v1240 = vlaneseq
        %v1241 = vshrl.u32 %v1240, 7
        %v1242 = vsub.s32 3, %v1241
        %v1243 = vrot.slane %v1226, %v1242
        %v1248 = vmul.f32 %v1225, %v1231
        %v1249 = vmul.f32 %v1224, %v1235
        %v1250 = vmul.f32 %v1223, %v1239
        %v1251 = vmul.f32 %v1222, %v1243
        %1252 = vrot.lane.b32.xlu0 %v1134, 1
        %v1253 = vpop.permute.xlu0 %1252
        %1254 = vrot.lane.b32.xlu0 %v1135, 1
        %v1255 = vpop.permute.xlu0 %1254
        %1256 = vrot.lane.b32.xlu0 %v1136, 1
        %v1257 = vpop.permute.xlu0 %1256
        %1258 = vrot.lane.b32.xlu0 %v1137, 1
        %v1259 = vpop.permute.xlu0 %1258
        %v1260 = vsel %vm549, %v1257, %v1259
        %v1261 = vsel %vm549, %v1255, %v1257
        %v1262 = vsel %vm549, %v1253, %v1255
        %v1263 = vsel %vm549, %v1259, %v1253
        %v1264 = vld [vmem:[%s554] sm:$0xf]
        %v1266 = vlaneseq
        %v1267 = vshrl.u32 %v1266, 7
        %v1268 = vsub.s32 0, %v1267
        %v1269 = vrot.slane %v1264, %v1268
        %v1270 = vlaneseq
        %v1271 = vshrl.u32 %v1270, 7
        %v1272 = vsub.s32 1, %v1271
        %v1273 = vrot.slane %v1264, %v1272
        %v1274 = vlaneseq
        %v1275 = vshrl.u32 %v1274, 7
        %v1276 = vsub.s32 2, %v1275
        %v1277 = vrot.slane %v1264, %v1276
        %v1278 = vlaneseq
        %v1279 = vshrl.u32 %v1278, 7
        %v1280 = vsub.s32 3, %v1279
        %v1281 = vrot.slane %v1264, %v1280
        %v1286 = vmul.f32 %v1263, %v1269
        %v1287 = vmul.f32 %v1262, %v1273
        %v1288 = vmul.f32 %v1261, %v1277
        %v1289 = vmul.f32 %v1260, %v1281
        %1290 = vrot.lane.b32.xlu0 %v1134, 127
        %v1291 = vpop.permute.xlu0 %1290
        %1292 = vrot.lane.b32.xlu0 %v1135, 127
        %v1293 = vpop.permute.xlu0 %1292
        %1294 = vrot.lane.b32.xlu0 %v1136, 127
        %v1295 = vpop.permute.xlu0 %1294
        %1296 = vrot.lane.b32.xlu0 %v1137, 127
        %v1297 = vpop.permute.xlu0 %1296
        %v1298 = vsel %vm589, %v1295, %v1297
        %v1299 = vsel %vm589, %v1293, %v1295
        %v1300 = vsel %vm589, %v1291, %v1293
        %v1301 = vsel %vm589, %v1297, %v1291
        %v1302 = vld [vmem:[%s594] sm:$0xf]
        %v1304 = vlaneseq
        %v1305 = vshrl.u32 %v1304, 7
        %v1306 = vsub.s32 0, %v1305
        %v1307 = vrot.slane %v1302, %v1306
        %v1308 = vlaneseq
        %v1309 = vshrl.u32 %v1308, 7
        %v1310 = vsub.s32 1, %v1309
        %v1311 = vrot.slane %v1302, %v1310
        %v1312 = vlaneseq
        %v1313 = vshrl.u32 %v1312, 7
        %v1314 = vsub.s32 2, %v1313
        %v1315 = vrot.slane %v1302, %v1314
        %v1316 = vlaneseq
        %v1317 = vshrl.u32 %v1316, 7
        %v1318 = vsub.s32 3, %v1317
        %v1319 = vrot.slane %v1302, %v1318
        %v1324 = vmul.f32 %v1300, %v1307
        %v1325 = vmul.f32 %v1299, %v1311
        %v1326 = vmul.f32 %v1298, %v1315
        %v1327 = vmul.f32 %v1301, %v1319
        %1328 = vrot.lane.b32.xlu0 %v1134, 113
        %v1329 = vpop.permute.xlu0 %1328
        %1330 = vrot.lane.b32.xlu0 %v1135, 113
        %v1331 = vpop.permute.xlu0 %1330
        %1332 = vrot.lane.b32.xlu0 %v1136, 113
        %v1333 = vpop.permute.xlu0 %1332
        %1334 = vrot.lane.b32.xlu0 %v1137, 113
        %v1335 = vpop.permute.xlu0 %1334
        %v1336 = vsel %vm629, %v1333, %v1335
        %v1337 = vsel %vm629, %v1331, %v1333
        %v1338 = vsel %vm629, %v1329, %v1331
        %v1339 = vsel %vm629, %v1335, %v1329
        %v1340 = vld [vmem:[%s634] sm:$0xf]
        %v1342 = vlaneseq
        %v1343 = vshrl.u32 %v1342, 7
        %v1344 = vsub.s32 0, %v1343
        %v1345 = vrot.slane %v1340, %v1344
        %v1346 = vlaneseq
        %v1347 = vshrl.u32 %v1346, 7
        %v1348 = vsub.s32 1, %v1347
        %v1349 = vrot.slane %v1340, %v1348
        %v1350 = vlaneseq
        %v1351 = vshrl.u32 %v1350, 7
        %v1352 = vsub.s32 2, %v1351
        %v1353 = vrot.slane %v1340, %v1352
        %v1354 = vlaneseq
        %v1355 = vshrl.u32 %v1354, 7
        %v1356 = vsub.s32 3, %v1355
        %v1357 = vrot.slane %v1340, %v1356
        %v1362 = vmul.f32 %v1338, %v1345
        %v1363 = vmul.f32 %v1337, %v1349
        %v1364 = vmul.f32 %v1336, %v1353
        %v1365 = vmul.f32 %v1339, %v1357
        %1366 = vrot.lane.b32.xlu0 %v1134, 112
        %v1367 = vpop.permute.xlu0 %1366
        %1368 = vrot.lane.b32.xlu0 %v1135, 112
        %v1369 = vpop.permute.xlu0 %1368
        %1370 = vrot.lane.b32.xlu0 %v1136, 112
        %v1371 = vpop.permute.xlu0 %1370
        %1372 = vrot.lane.b32.xlu0 %v1137, 112
        %v1373 = vpop.permute.xlu0 %1372
        %v1374 = vsel %vm669, %v1371, %v1373
        %v1375 = vsel %vm669, %v1369, %v1371
        %v1376 = vsel %vm669, %v1367, %v1369
        %v1377 = vsel %vm669, %v1373, %v1367
        %v1378 = vld [vmem:[%s674] sm:$0xf]
        %v1380 = vlaneseq
        %v1381 = vshrl.u32 %v1380, 7
        %v1382 = vsub.s32 0, %v1381
        %v1383 = vrot.slane %v1378, %v1382
        %v1384 = vlaneseq
        %v1385 = vshrl.u32 %v1384, 7
        %v1386 = vsub.s32 1, %v1385
        %v1387 = vrot.slane %v1378, %v1386
        %v1388 = vlaneseq
        %v1389 = vshrl.u32 %v1388, 7
        %v1390 = vsub.s32 2, %v1389
        %v1391 = vrot.slane %v1378, %v1390
        %v1392 = vlaneseq
        %v1393 = vshrl.u32 %v1392, 7
        %v1394 = vsub.s32 3, %v1393
        %v1395 = vrot.slane %v1378, %v1394
        %v1400 = vmul.f32 %v1376, %v1383
        %v1401 = vmul.f32 %v1375, %v1387
        %v1402 = vmul.f32 %v1374, %v1391
        %v1403 = vmul.f32 %v1377, %v1395
        %1404 = vrot.lane.b32.xlu0 %v1134, 111
        %v1405 = vpop.permute.xlu0 %1404
        %1406 = vrot.lane.b32.xlu0 %v1135, 111
        %v1407 = vpop.permute.xlu0 %1406
        %1408 = vrot.lane.b32.xlu0 %v1136, 111
        %v1409 = vpop.permute.xlu0 %1408
        %1410 = vrot.lane.b32.xlu0 %v1137, 111
        %v1411 = vpop.permute.xlu0 %1410
        %v1412 = vsel %vm709, %v1409, %v1411
        %v1413 = vsel %vm709, %v1407, %v1409
        %v1414 = vsel %vm709, %v1405, %v1407
        %v1415 = vsel %vm709, %v1411, %v1405
        %v1416 = vld [vmem:[%s714] sm:$0xf]
        %v1418 = vlaneseq
        %v1419 = vshrl.u32 %v1418, 7
        %v1420 = vsub.s32 0, %v1419
        %v1421 = vrot.slane %v1416, %v1420
        %v1422 = vlaneseq
        %v1423 = vshrl.u32 %v1422, 7
        %v1424 = vsub.s32 1, %v1423
        %v1425 = vrot.slane %v1416, %v1424
        %v1426 = vlaneseq
        %v1427 = vshrl.u32 %v1426, 7
        %v1428 = vsub.s32 2, %v1427
        %v1429 = vrot.slane %v1416, %v1428
        %v1430 = vlaneseq
        %v1431 = vshrl.u32 %v1430, 7
        %v1432 = vsub.s32 3, %v1431
        %v1433 = vrot.slane %v1416, %v1432
        %v1438 = vmul.f32 %v1414, %v1421
        %v1439 = vmul.f32 %v1413, %v1425
        %v1440 = vmul.f32 %v1412, %v1429
        %v1441 = vmul.f32 %v1415, %v1433
        %v1442 = vpack.c.bf16 %v1210, %v1172
        %v1443 = vpack.c.bf16 %v1211, %v1173
        %v1444 = vpack.c.bf16 %v1212, %v1174
        %v1445 = vpack.c.bf16 %v1213, %v1175
        %v1446 = vpack.c.bf16 %v1286, %v1248
        %v1447 = vpack.c.bf16 %v1287, %v1249
        %v1448 = vpack.c.bf16 %v1288, %v1250
        %v1449 = vpack.c.bf16 %v1289, %v1251
        %v1450 = vpack.c.bf16 %v1324, %v1134
        %v1451 = vpack.c.bf16 %v1325, %v1135
        %v1452 = vpack.c.bf16 %v1326, %v1136
        %v1453 = vpack.c.bf16 %v1327, %v1137
        %v1454 = vpack.c.bf16 %v1400, %v1362
        %v1455 = vpack.c.bf16 %v1401, %v1363
        %v1456 = vpack.c.bf16 %v1402, %v1364
        %v1457 = vpack.c.bf16 %v1403, %v1365
        %v1458 = vpack.c.bf16 %v1438, %v1438
        %v1459 = vpack.c.bf16 %v1439, %v1439
        %v1460 = vpack.c.bf16 %v1440, %v1440
        %v1461 = vpack.c.bf16 %v1441, %v1441
        %v1463 = vsel %vm770, %v1458, 0
        %v1466 = vsel %vm770, %v1459, 0
        %v1469 = vsel %vm770, %v1460, 0
        %v1472 = vsel %vm770, %v1461, 0
        %1474 = vmatprep.subr.bf16.mxu0 %v1443
        %1475 = vmatpush1.bf16.msra.mxu0 %v1442
        %1476 = vmatprep.subr.bf16.mxu0 %v1447
        %1477 = vmatpush1.bf16.msra.mxu0 %v1446
        %1478 = vmatprep.subr.bf16.mxu0 %v1451
        %1479 = vmatpush1.bf16.msra.mxu0 %v1450
        %1480 = vmatprep.subr.bf16.mxu0 %v1455
        %1481 = vmatpush1.bf16.msra.mxu0 %v1454
        %1482 = vmatprep.subr.bf16.mxu0 %v1466
        %1483 = vmatpush1.bf16.msra.mxu0 %v1463
        %1484 = vmatprep.subr.bf16.mxu0 0
        %1485 = vmatpush1.bf16.msra.mxu0 0
        %1486 = vmatprep.subr.bf16.mxu0 0
        %1487 = vmatpush1.bf16.msra.mxu0 0
        %1488 = vmatprep.subr.bf16.mxu0 0
        %1489 = vmatpush1.bf16.msra.mxu0 0
        %1490 = vmatprep.subr.bf16.mxu0 0
        %1491 = vmatpush1.bf16.msra.mxu0 0
        %1492 = vmatprep.subr.bf16.mxu0 0
        %1493 = vmatpush1.bf16.msra.mxu0 0
        %1494 = vmatprep.subr.bf16.mxu0 0
        %1495 = vmatpush1.bf16.msra.mxu0 0
        %1496 = vmatprep.subr.bf16.mxu0 0
        %1497 = vmatpush1.bf16.msra.mxu0 0
        %1498 = vmatprep.subr.bf16.mxu0 0
        %1499 = vmatpush1.bf16.msra.mxu0 0
        %1500 = vmatprep.subr.bf16.mxu0 0
        %1501 = vmatpush1.bf16.msra.mxu0 0
        %1502 = vmatprep.subr.bf16.mxu0 0
        %1503 = vmatpush1.bf16.msra.mxu0 0
        %1504 = vmatprep.subr.bf16.mxu0 0
        %1505 = vmatpush1.bf16.msra.mxu0 0
        %1506 = vmatprep.mubr.bf16.mxu0 0
        %1507 = vmatmul.mubr.bf16.gmra.mrb[0].mxu0 %v768
        %v1508 = vpop.f32.mrb[0].mxu0
        %v1509 = vadd.f32 %v764, %v1508
        %v1510 = vpop.f32.mrb[0].mxu0
        %v1511 = vadd.f32 %v764, %v1510
        %v1512 = vpop.f32.mrb[0].mxu0
        %v1513 = vpop.f32.mrb[0].mxu0
        %1514 = vdwg.mxu0
        %1515 = vmatprep.subr.bf16.mxu0 %v1445
        %1516 = vmatpush1.bf16.msra.mxu0 %v1444
        %1517 = vmatprep.subr.bf16.mxu0 %v1449
        %1518 = vmatpush1.bf16.msra.mxu0 %v1448
        %1519 = vmatprep.subr.bf16.mxu0 %v1453
        %1520 = vmatpush1.bf16.msra.mxu0 %v1452
        %1521 = vmatprep.subr.bf16.mxu0 %v1457
        %1522 = vmatpush1.bf16.msra.mxu0 %v1456
        %1523 = vmatprep.subr.bf16.mxu0 %v1472
        %1524 = vmatpush1.bf16.msra.mxu0 %v1469
        %1525 = vmatprep.subr.bf16.mxu0 0
        %1526 = vmatpush1.bf16.msra.mxu0 0
        %1527 = vmatprep.subr.bf16.mxu0 0
        %1528 = vmatpush1.bf16.msra.mxu0 0
        %1529 = vmatprep.subr.bf16.mxu0 0
        %1530 = vmatpush1.bf16.msra.mxu0 0
        %1531 = vmatprep.subr.bf16.mxu0 0
        %1532 = vmatpush1.bf16.msra.mxu0 0
        %1533 = vmatprep.subr.bf16.mxu0 0
        %1534 = vmatpush1.bf16.msra.mxu0 0
        %1535 = vmatprep.subr.bf16.mxu0 0
        %1536 = vmatpush1.bf16.msra.mxu0 0
        %1537 = vmatprep.subr.bf16.mxu0 0
        %1538 = vmatpush1.bf16.msra.mxu0 0
        %1539 = vmatprep.subr.bf16.mxu0 0
        %1540 = vmatpush1.bf16.msra.mxu0 0
        %1541 = vmatprep.subr.bf16.mxu0 0
        %1542 = vmatpush1.bf16.msra.mxu0 0
        %1543 = vmatprep.subr.bf16.mxu0 0
        %1544 = vmatpush1.bf16.msra.mxu0 0
        %1545 = vmatprep.subr.bf16.mxu0 0
        %1546 = vmatpush1.bf16.msra.mxu0 0
        %1547 = vmatprep.mubr.bf16.mxu0 0
        %1548 = vmatmul.mubr.bf16.gmra.mrb[0].mxu0 %v768
        %v1549 = vpop.f32.mrb[0].mxu0
        %v1550 = vadd.f32 %v764, %v1549
        %v1551 = vpop.f32.mrb[0].mxu0
        %v1552 = vadd.f32 %v764, %v1551
        %v1553 = vpop.f32.mrb[0].mxu0
        %v1554 = vpop.f32.mrb[0].mxu0
        %1555 = vdwg.mxu0
        %v1556 = vmax.f32 %v1509, 0.0
        %v1557 = vmax.f32 %v1511, 0.0
        %v1558 = vmax.f32 %v1550, 0.0
        %v1559 = vmax.f32 %v1552, 0.0
        %1560 = vrot.lane.b32.xlu0 %v1556, 17
        %v1561 = vpop.permute.xlu0 %1560
        %1562 = vrot.lane.b32.xlu0 %v1557, 17
        %v1563 = vpop.permute.xlu0 %1562
        %1564 = vrot.lane.b32.xlu0 %v1558, 17
        %v1565 = vpop.permute.xlu0 %1564
        %1566 = vrot.lane.b32.xlu0 %v1559, 17
        %v1567 = vpop.permute.xlu0 %1566
        %v1568 = vsel %vm430, %v1565, %v1567
        %v1569 = vsel %vm430, %v1563, %v1565
        %v1570 = vsel %vm430, %v1561, %v1563
        %v1571 = vsel %vm430, %v1567, %v1561
        %v1572 = vmul.f32 %v1571, %v1155
        %v1573 = vmul.f32 %v1570, %v1159
        %v1574 = vmul.f32 %v1569, %v1163
        %v1575 = vmul.f32 %v1568, %v1167
        %1576 = vrot.lane.b32.xlu0 %v1556, 16
        %v1577 = vpop.permute.xlu0 %1576
        %1578 = vrot.lane.b32.xlu0 %v1557, 16
        %v1579 = vpop.permute.xlu0 %1578
        %1580 = vrot.lane.b32.xlu0 %v1558, 16
        %v1581 = vpop.permute.xlu0 %1580
        %1582 = vrot.lane.b32.xlu0 %v1559, 16
        %v1583 = vpop.permute.xlu0 %1582
        %v1584 = vsel %vm469, %v1581, %v1583
        %v1585 = vsel %vm469, %v1579, %v1581
        %v1586 = vsel %vm469, %v1577, %v1579
        %v1587 = vsel %vm469, %v1583, %v1577
        %v1588 = vmul.f32 %v1587, %v1193
        %v1589 = vmul.f32 %v1586, %v1197
        %v1590 = vmul.f32 %v1585, %v1201
        %v1591 = vmul.f32 %v1584, %v1205
        %1592 = vrot.lane.b32.xlu0 %v1556, 15
        %v1593 = vpop.permute.xlu0 %1592
        %1594 = vrot.lane.b32.xlu0 %v1557, 15
        %v1595 = vpop.permute.xlu0 %1594
        %1596 = vrot.lane.b32.xlu0 %v1558, 15
        %v1597 = vpop.permute.xlu0 %1596
        %1598 = vrot.lane.b32.xlu0 %v1559, 15
        %v1599 = vpop.permute.xlu0 %1598
        %v1600 = vsel %vm509, %v1597, %v1599
        %v1601 = vsel %vm509, %v1595, %v1597
        %v1602 = vsel %vm509, %v1593, %v1595
        %v1603 = vsel %vm509, %v1599, %v1593
        %v1604 = vmul.f32 %v1603, %v1231
        %v1605 = vmul.f32 %v1602, %v1235
        %v1606 = vmul.f32 %v1601, %v1239
        %v1607 = vmul.f32 %v1600, %v1243
        %1608 = vrot.lane.b32.xlu0 %v1556, 1
        %v1609 = vpop.permute.xlu0 %1608
        %1610 = vrot.lane.b32.xlu0 %v1557, 1
        %v1611 = vpop.permute.xlu0 %1610
        %1612 = vrot.lane.b32.xlu0 %v1558, 1
        %v1613 = vpop.permute.xlu0 %1612
        %1614 = vrot.lane.b32.xlu0 %v1559, 1
        %v1615 = vpop.permute.xlu0 %1614
        %v1616 = vsel %vm549, %v1613, %v1615
        %v1617 = vsel %vm549, %v1611, %v1613
        %v1618 = vsel %vm549, %v1609, %v1611
        %v1619 = vsel %vm549, %v1615, %v1609
        %v1620 = vmul.f32 %v1619, %v1269
        %v1621 = vmul.f32 %v1618, %v1273
        %v1622 = vmul.f32 %v1617, %v1277
        %v1623 = vmul.f32 %v1616, %v1281
        %1624 = vrot.lane.b32.xlu0 %v1556, 127
        %v1625 = vpop.permute.xlu0 %1624
        %1626 = vrot.lane.b32.xlu0 %v1557, 127
        %v1627 = vpop.permute.xlu0 %1626
        %1628 = vrot.lane.b32.xlu0 %v1558, 127
        %v1629 = vpop.permute.xlu0 %1628
        %1630 = vrot.lane.b32.xlu0 %v1559, 127
        %v1631 = vpop.permute.xlu0 %1630
        %v1632 = vsel %vm589, %v1629, %v1631
        %v1633 = vsel %vm589, %v1627, %v1629
        %v1634 = vsel %vm589, %v1625, %v1627
        %v1635 = vsel %vm589, %v1631, %v1625
        %v1636 = vmul.f32 %v1634, %v1307
        %v1637 = vmul.f32 %v1633, %v1311
        %v1638 = vmul.f32 %v1632, %v1315
        %v1639 = vmul.f32 %v1635, %v1319
        %1640 = vrot.lane.b32.xlu0 %v1556, 113
        %v1641 = vpop.permute.xlu0 %1640
        %1642 = vrot.lane.b32.xlu0 %v1557, 113
        %v1643 = vpop.permute.xlu0 %1642
        %1644 = vrot.lane.b32.xlu0 %v1558, 113
        %v1645 = vpop.permute.xlu0 %1644
        %1646 = vrot.lane.b32.xlu0 %v1559, 113
        %v1647 = vpop.permute.xlu0 %1646
        %v1648 = vsel %vm629, %v1645, %v1647
        %v1649 = vsel %vm629, %v1643, %v1645
        %v1650 = vsel %vm629, %v1641, %v1643
        %v1651 = vsel %vm629, %v1647, %v1641
        %v1652 = vmul.f32 %v1650, %v1345
        %v1653 = vmul.f32 %v1649, %v1349
        %v1654 = vmul.f32 %v1648, %v1353
        %v1655 = vmul.f32 %v1651, %v1357
        %1656 = vrot.lane.b32.xlu0 %v1556, 112
        %v1657 = vpop.permute.xlu0 %1656
        %1658 = vrot.lane.b32.xlu0 %v1557, 112
        %v1659 = vpop.permute.xlu0 %1658
        %1660 = vrot.lane.b32.xlu0 %v1558, 112
        %v1661 = vpop.permute.xlu0 %1660
        %1662 = vrot.lane.b32.xlu0 %v1559, 112
        %v1663 = vpop.permute.xlu0 %1662
        %v1664 = vsel %vm669, %v1661, %v1663
        %v1665 = vsel %vm669, %v1659, %v1661
        %v1666 = vsel %vm669, %v1657, %v1659
        %v1667 = vsel %vm669, %v1663, %v1657
        %v1668 = vmul.f32 %v1666, %v1383
        %v1669 = vmul.f32 %v1665, %v1387
        %v1670 = vmul.f32 %v1664, %v1391
        %v1671 = vmul.f32 %v1667, %v1395
        %1672 = vrot.lane.b32.xlu0 %v1556, 111
        %v1673 = vpop.permute.xlu0 %1672
        %1674 = vrot.lane.b32.xlu0 %v1557, 111
        %v1675 = vpop.permute.xlu0 %1674
        %1676 = vrot.lane.b32.xlu0 %v1558, 111
        %v1677 = vpop.permute.xlu0 %1676
        %1678 = vrot.lane.b32.xlu0 %v1559, 111
        %v1679 = vpop.permute.xlu0 %1678
        %v1680 = vsel %vm709, %v1677, %v1679
        %v1681 = vsel %vm709, %v1675, %v1677
        %v1682 = vsel %vm709, %v1673, %v1675
        %v1683 = vsel %vm709, %v1679, %v1673
        %v1684 = vmul.f32 %v1682, %v1421
        %v1685 = vmul.f32 %v1681, %v1425
        %v1686 = vmul.f32 %v1680, %v1429
        %v1687 = vmul.f32 %v1683, %v1433
        %v1688 = vpack.c.bf16 %v1588, %v1572
        %v1689 = vpack.c.bf16 %v1589, %v1573
        %v1690 = vpack.c.bf16 %v1590, %v1574
        %v1691 = vpack.c.bf16 %v1591, %v1575
        %v1692 = vpack.c.bf16 %v1620, %v1604
        %v1693 = vpack.c.bf16 %v1621, %v1605
        %v1694 = vpack.c.bf16 %v1622, %v1606
        %v1695 = vpack.c.bf16 %v1623, %v1607
        %v1696 = vpack.c.bf16 %v1636, %v1556
        %v1697 = vpack.c.bf16 %v1637, %v1557
        %v1698 = vpack.c.bf16 %v1638, %v1558
        %v1699 = vpack.c.bf16 %v1639, %v1559
        %v1700 = vpack.c.bf16 %v1668, %v1652
        %v1701 = vpack.c.bf16 %v1669, %v1653
        %v1702 = vpack.c.bf16 %v1670, %v1654
        %v1703 = vpack.c.bf16 %v1671, %v1655
        %v1704 = vpack.c.bf16 %v1684, %v1684
        %v1705 = vpack.c.bf16 %v1685, %v1685
        %v1706 = vpack.c.bf16 %v1686, %v1686
        %v1707 = vpack.c.bf16 %v1687, %v1687
        %v1709 = vsel %vm770, %v1704, 0
        %v1712 = vsel %vm770, %v1705, 0
        %v1715 = vsel %vm770, %v1706, 0
        %v1718 = vsel %vm770, %v1707, 0
        %1720 = vmatprep.subr.bf16.mxu0 %v1689
        %1721 = vmatpush1.bf16.msra.mxu0 %v1688
        %1722 = vmatprep.subr.bf16.mxu0 %v1693
        %1723 = vmatpush1.bf16.msra.mxu0 %v1692
        %1724 = vmatprep.subr.bf16.mxu0 %v1697
        %1725 = vmatpush1.bf16.msra.mxu0 %v1696
        %1726 = vmatprep.subr.bf16.mxu0 %v1701
        %1727 = vmatpush1.bf16.msra.mxu0 %v1700
        %1728 = vmatprep.subr.bf16.mxu0 %v1712
        %1729 = vmatpush1.bf16.msra.mxu0 %v1709
        %1730 = vmatprep.subr.bf16.mxu0 0
        %1731 = vmatpush1.bf16.msra.mxu0 0
        %1732 = vmatprep.subr.bf16.mxu0 0
        %1733 = vmatpush1.bf16.msra.mxu0 0
        %1734 = vmatprep.subr.bf16.mxu0 0
        %1735 = vmatpush1.bf16.msra.mxu0 0
        %1736 = vmatprep.subr.bf16.mxu0 0
        %1737 = vmatpush1.bf16.msra.mxu0 0
        %1738 = vmatprep.subr.bf16.mxu0 0
        %1739 = vmatpush1.bf16.msra.mxu0 0
        %1740 = vmatprep.subr.bf16.mxu0 0
        %1741 = vmatpush1.bf16.msra.mxu0 0
        %1742 = vmatprep.subr.bf16.mxu0 0
        %1743 = vmatpush1.bf16.msra.mxu0 0
        %1744 = vmatprep.subr.bf16.mxu0 0
        %1745 = vmatpush1.bf16.msra.mxu0 0
        %1746 = vmatprep.subr.bf16.mxu0 0
        %1747 = vmatpush1.bf16.msra.mxu0 0
        %1748 = vmatprep.subr.bf16.mxu0 0
        %1749 = vmatpush1.bf16.msra.mxu0 0
        %1750 = vmatprep.subr.bf16.mxu0 0
        %1751 = vmatpush1.bf16.msra.mxu0 0
        %1752 = vmatprep.mubr.bf16.mxu0 0
        %1753 = vmatmul.mubr.bf16.gmra.mrb[0].mxu0 %v1023
        %v1754 = vpop.f32.mrb[0].mxu0
        %v1755 = vadd.f32 %v1020, %v1754
        %v1756 = vpop.f32.mrb[0].mxu0
        %v1757 = vadd.f32 %v1020, %v1756
        %v1758 = vpop.f32.mrb[0].mxu0
        %v1759 = vpop.f32.mrb[0].mxu0
        %1760 = vdwg.mxu0
        %1761 = vmatprep.subr.bf16.mxu0 %v1691
        %1762 = vmatpush1.bf16.msra.mxu0 %v1690
        %1763 = vmatprep.subr.bf16.mxu0 %v1695
        %1764 = vmatpush1.bf16.msra.mxu0 %v1694
        %1765 = vmatprep.subr.bf16.mxu0 %v1699
        %1766 = vmatpush1.bf16.msra.mxu0 %v1698
        %1767 = vmatprep.subr.bf16.mxu0 %v1703
        %1768 = vmatpush1.bf16.msra.mxu0 %v1702
        %1769 = vmatprep.subr.bf16.mxu0 %v1718
        %1770 = vmatpush1.bf16.msra.mxu0 %v1715
        %1771 = vmatprep.subr.bf16.mxu0 0
        %1772 = vmatpush1.bf16.msra.mxu0 0
        %1773 = vmatprep.subr.bf16.mxu0 0
        %1774 = vmatpush1.bf16.msra.mxu0 0
        %1775 = vmatprep.subr.bf16.mxu0 0
        %1776 = vmatpush1.bf16.msra.mxu0 0
        %1777 = vmatprep.subr.bf16.mxu0 0
        %1778 = vmatpush1.bf16.msra.mxu0 0
        %1779 = vmatprep.subr.bf16.mxu0 0
        %1780 = vmatpush1.bf16.msra.mxu0 0
        %1781 = vmatprep.subr.bf16.mxu0 0
        %1782 = vmatpush1.bf16.msra.mxu0 0
        %1783 = vmatprep.subr.bf16.mxu0 0
        %1784 = vmatpush1.bf16.msra.mxu0 0
        %1785 = vmatprep.subr.bf16.mxu0 0
        %1786 = vmatpush1.bf16.msra.mxu0 0
        %1787 = vmatprep.subr.bf16.mxu0 0
        %1788 = vmatpush1.bf16.msra.mxu0 0
        %1789 = vmatprep.subr.bf16.mxu0 0
        %1790 = vmatpush1.bf16.msra.mxu0 0
        %1791 = vmatprep.subr.bf16.mxu0 0
        %1792 = vmatpush1.bf16.msra.mxu0 0
        %1793 = vmatprep.mubr.bf16.mxu0 0
        %1794 = vmatmul.mubr.bf16.gmra.mrb[0].mxu0 %v1023
        %v1795 = vpop.f32.mrb[0].mxu0
        %v1796 = vadd.f32 %v1020, %v1795
        %v1797 = vpop.f32.mrb[0].mxu0
        %v1798 = vadd.f32 %v1020, %v1797
        %v1799 = vpop.f32.mrb[0].mxu0
        %v1800 = vpop.f32.mrb[0].mxu0
        %1801 = vdwg.mxu0
        %v1802 = vmul.f32 %v1755, %v1119
        %v1803 = vmul.f32 %v1757, %v1119
        %v1804 = vmul.f32 %v1796, %v1119
        %v1805 = vmul.f32 %v1798, %v1119
        %v1806 = vadd.f32 %v1802, %v1134
        %v1807 = vadd.f32 %v1803, %v1135
        %v1808 = vadd.f32 %v1804, %v1136
        %v1809 = vadd.f32 %v1805, %v1137
        %1810 = vst [vmem:[%s383 + $0x20] sm:$0xff] %v1806
        %1811 = vst [vmem:[%s383 + $0x28] sm:$0xff] %v1807
        %1812 = vst [vmem:[%s383 + $0x30] sm:$0xff] %v1808
        %1813 = vst [vmem:[%s383 + $0x38] sm:$0xff] %v1809
        %s1814 = sand.u32 %s218, 1
        %s1815 = scalar_lea.sflag [#allocation6], %s1814
        %s1816 = sand.u32 %s218, 1
        %s1817 = smul.addr %s1816, 64
        %s1818 = scalar_lea.vmem [#allocation9], %s1817
        // Predicated region
        $region57: #{tpu_custom_call.1} parent=47 // pred_check
          %p1819 = pneg %p228
        $region58: #{tpu_custom_call.1} parent=47 // pred_check_branch
          %1821 = sbr.rel (%p1819) target = $region60
        $region59: #{tpu_custom_call.1} parent=47 // pred_region
          %s1823 = ssub.s32 1024, 1024
          %1824 = vsyncadd %s1815, %s1823
          %s1825 = smul.addr %s30, 8
          %s1826 = smul.addr %s1825, 128
          %s1827 = scalar_lea.hbm %s8, %s1826
          %s1829 = sshll.u32 %s1818, 4
          %s1830 = int_to_ptr.vmem [resolvable:$true] %s1829
          %1832 = dma.vmem_to_hbm [thread:$0]  %s1830, 1024, %s1827, %s1815
        $region60: #{tpu_custom_call.1} parent=47 // pred_fallthru
          _
      $region48: #{tpu_custom_call.1} parent=5 // pred_fallthru
        _
      %p1833 = scmp.le.s32.totalorder 2, %s25
      // Predicated region
      $region61: #{tpu_custom_call.1} parent=5 // pred_check
        %p1834 = pneg %p1833
      $region62: #{tpu_custom_call.1} parent=5 // pred_check_branch
        %1836 = sbr.rel (%p1834) target = $region64
      $region63: #{tpu_custom_call.1} parent=5 // pred_region
        %s1837 = ssub.s32 %s25, 2
        // Predicated region
        $region65: #{tpu_custom_call.1} parent=63 // pred_check
          %p1838 = pneg %p234
        $region66: #{tpu_custom_call.1} parent=63 // pred_check_branch
          %1840 = sbr.rel (%p1838) target = $region68
        $region67: #{tpu_custom_call.1} parent=63 // pred_region
          %s1841 = sand.u32 %s219, 1
          %s1842 = scalar_lea.sflag [#allocation6], %s1841
          %s1843 = sand.u32 %s219, 1
          %s1844 = smul.addr %s1843, 64
          %s1845 = scalar_lea.vmem [#allocation9], %s1844
          %1846 = dma.done %s1842, 1024
        $region68: #{tpu_custom_call.1} parent=63 // pred_fallthru
          _
      $region64: #{tpu_custom_call.1} parent=5 // pred_fallthru
        _
    $region6: #{tpu_custom_call.1} parent=1 // loop_footer
      %s29 = sadd.s32 1, %s25
    $region7: #{tpu_custom_call.1} parent=1 // loop_footer_branch
      %24 = sbr.rel target = $region3
    $region8: #{tpu_custom_call.1} parent=1 // loop_exit
      _
    %1847 = vsyncpa [#allocation5], 1
    %s1848 = scalar_lea.sflag [#allocation5], 1
    %1849 = vsyncpa %s1848, 1
    %1850 = vsyncpa [#allocation6], 1
    %s1851 = scalar_lea.sflag [#allocation6], 1
    %1852 = vsyncpa %s1851, 1
    %1853 = vsyncpa [#allocation7], 1
    %s1854 = scalar_lea.sflag [#allocation7], 1
    %1855 = vsyncpa %s1854, 1

</llo_original>
